<compile_context>
chip_gen: v5e
topology: v5e:2x2
jax: 0.10.0
libtpu: 0.0.40
codegen_flags: <defaults>
</compile_context>

<pallas_src>
import functools
import numpy as np
import jax
import jax.numpy as jnp
from jax.experimental import pallas as pl
from jax.experimental.pallas import tpu as pltpu

_LANE = 128  # vreg lane width; Cout is padded to this for lane-dense stores


# ----------------------------- Pallas kernels ------------------------------

def _conv_act_kernel(p_ref, w_ref, b_ref, o_ref, *, negative_slope):
    # (TM, K) bf16 @ (K, 128) bf16 -> f32 acc, + bias, optional LeakyReLU.
    y = jnp.dot(p_ref[...], w_ref[...], preferred_element_type=jnp.float32)
    y = y + b_ref[...]
    if negative_slope is not None:
        y = jnp.where(y >= 0, y, negative_slope * y)
    o_ref[...] = y.astype(o_ref.dtype)


def _conv_bn_act_kernel(p_ref, w_ref, b_ref, g_ref, bt_ref, o_ref, *,
                        eps, negative_slope):
    # Whole (P, 128) slab resident in VMEM: conv matmul + bias + BatchNorm2d
    # (training-mode biased batch stats over all P = N*Ho*Wo rows) + LeakyReLU,
    # fused in one pass.  Padded lanes (cols >= Cout) stay exactly zero.
    y = jnp.dot(p_ref[...], w_ref[...], preferred_element_type=jnp.float32)
    y = y + b_ref[...]
    mean = jnp.mean(y, axis=0, keepdims=True)
    var = jnp.mean(jnp.square(y - mean), axis=0, keepdims=True)
    y = (y - mean) * jax.lax.rsqrt(var + eps)
    y = y * g_ref[...] + bt_ref[...]
    y = jnp.where(y >= 0, y, negative_slope * y)
    o_ref[...] = y.astype(o_ref.dtype)


# ------------------------------ wrappers ------------------------------------

def _pad_cols(a, cols, value=0.0):
    """Pad the last dim of `a` up to `cols` with `value`."""
    pad = cols - a.shape[-1]
    if pad == 0:
        return a
    return jnp.pad(a, [(0, 0)] * (a.ndim - 1) + [(0, pad)],
                   constant_values=value)


def conv_fused(patches, w_p, b_p, *, gamma=None, beta=None,
               negative_slope=0.2, out_dtype=jnp.bfloat16, tm=256):
    """Fused conv-as-matmul layer.

    patches: (P, K) bf16   w_p: (K, Cp) bf16   b_p/gamma/beta: (1, Cp) f32
    (Cp = Cout padded to 128 lanes).  Returns (P, Cp) `out_dtype`; caller
    slices the valid Cout columns.
    """
    patches = patches.astype(jnp.bfloat16)
    P, K = patches.shape
    Cp = w_p.shape[1]

    if gamma is not None:
        # BatchNorm needs global batch statistics over all P rows, so the whole
        # (P, Cp) slab stays VMEM-resident as a single block (tiny here).
        kern = functools.partial(_conv_bn_act_kernel, eps=1e-5,
                                 negative_slope=negative_slope)
        return pl.pallas_call(
            kern,
            out_shape=jax.ShapeDtypeStruct((P, Cp), out_dtype),
        )(patches, w_p, b_p, gamma, beta)

    # No-norm layers: tile the independent P axis; "parallel" lets v7x shard
    # the grid across its two TensorCores (no-op on v5e/v6e).  At the test
    # shapes a single block covers all of P (grid == (1,)).
    tm_eff = P if P <= tm else tm
    kern = functools.partial(_conv_act_kernel, negative_slope=negative_slope)
    return pl.pallas_call(
        kern,
        out_shape=jax.ShapeDtypeStruct((P, Cp), out_dtype),
        grid=(pl.cdiv(P, tm_eff),),
        in_specs=[
            pl.BlockSpec((tm_eff, K), lambda i: (i, 0)),
            pl.BlockSpec((K, Cp), lambda i: (0, 0)),
            pl.BlockSpec((1, Cp), lambda i: (0, 0)),
        ],
        out_specs=pl.BlockSpec((tm_eff, Cp), lambda i: (i, 0)),
        compiler_params=pltpu.CompilerParams(
            dimension_semantics=("parallel",),
            # At production sizes raise the scoped VMEM limit via
            # vmem_limit_bytes=... (and halve tile budgets on v7x: 64 MiB VMEM).
        ),
    )(patches, w_p, b_p)


# ------------------------------ glue (im2col) --------------------------------

def im2col_nhwc(x, kh, kw, stride, pad):
    """x: (N, H, W, C) -> patches (N*Ho*Wo, kh*kw*C) with (i, j, c) ordering.

    Pure data movement; fused by XLA under jit.  Kept in bf16 to halve the
    duplicated-patch footprint.
    """
    x = jnp.pad(x, ((0, 0), (pad, pad), (pad, pad), (0, 0)))
    N, Hp, Wp, C = x.shape
    Ho = (Hp - kh) // stride + 1
    Wo = (Wp - kw) // stride + 1
    cols = []
    for i in range(kh):
        for j in range(kw):
            cols.append(
                x[:, i:i + (Ho - 1) * stride + 1:stride,
                     j:j + (Wo - 1) * stride + 1:stride, :]
            )
    patches = jnp.concatenate(cols, axis=-1)
    return patches.reshape(N * Ho * Wo, kh * kw * C), (N, Ho, Wo)


# ------------------------- parameters / forward ------------------------------

def make_layer_specs(input_nc, ndf=8, n_layer=3):
    """(cin, cout, stride, use_bn) per conv, mirroring NLayerDiscriminator.__init__."""
    specs = [(input_nc, ndf, 2, False)]
    nf_mult = 1
    for n in range(1, n_layer):
        nf_mult_prev = nf_mult
        nf_mult = min(2 ** n, 8)
        specs.append((ndf * nf_mult_prev, ndf * nf_mult, 2, True))
    nf_mult_prev = nf_mult
    nf_mult = min(2 ** n_layer, 8)
    specs.append((ndf * nf_mult_prev, ndf * nf_mult, 1, True))
    specs.append((ndf * nf_mult, 1, 1, False))   # final conv, no norm / no activation
    return specs


def init_params(key, specs, kw=4):
    """Raw torch-layout parameters: w (Cout, Cin, kh, kw), b/gamma/beta (Cout,)."""
    params = []
    for (cin, cout, stride, use_bn) in specs:
        key, k1, k2 = jax.random.split(key, 3)
        fan_in = cin * kw * kw
        w = jax.random.normal(k1, (cout, cin, kw, kw), jnp.float32) / np.sqrt(fan_in)
        b = jax.random.normal(k2, (cout,), jnp.float32) * 0.01
        gamma = jnp.ones((cout,), jnp.float32) if use_bn else None
        beta = jnp.zeros((cout,), jnp.float32) if use_bn else None
        params.append(dict(w=w, b=b, gamma=gamma, beta=beta))
    return params


def prepare_params(params, specs, kw=4):
    """One-time layout prep: torch OIHW weight -> (kh*kw*Cin, Cout) bf16 matrix,
    all per-channel vectors padded to 128 lanes.  Keeps this data movement out
    of the per-call jitted forward."""
    prepared = []
    for (cin, cout, stride, use_bn), p in zip(specs, params):
        cp = ((cout + _LANE - 1) // _LANE) * _LANE
        # torch weight (Cout, Cin, kh, kw) -> (kh*kw*Cin, Cout), matching patch order.
        w_mat = jnp.transpose(p["w"], (2, 3, 1, 0)).reshape(kw * kw * cin, cout)
        w_p = _pad_cols(w_mat.astype(jnp.bfloat16), cp)
        b_p = _pad_cols(p["b"].reshape(1, cout).astype(jnp.float32), cp)
        if use_bn:
            g_p = _pad_cols(p["gamma"].reshape(1, cout).astype(jnp.float32), cp, 1.0)
            bt_p = _pad_cols(p["beta"].reshape(1, cout).astype(jnp.float32), cp)
        else:
            g_p = bt_p = None
        prepared.append(dict(w=w_p, b=b_p, gamma=g_p, beta=bt_p))
    return prepared


def nlayer_discriminator_forward(x_nchw, prepared, specs, kw=4, pad=2):
    """Forward pass equivalent to NLayerDiscriminator.model(input); use_sigmoid=False.

    BatchNorm uses training-mode batch statistics (matches a freshly built
    torch module in .train()); matmuls run with bf16 operands / f32 accumulation.
    """
    x = jnp.transpose(x_nchw, (0, 2, 3, 1)).astype(jnp.bfloat16)  # NCHW -> NHWC
    n_conv = len(specs)
    for li, ((cin, cout, stride, use_bn), p) in enumerate(zip(specs, prepared)):
        is_last = li == n_conv - 1
        patches, (N, Ho, Wo) = im2col_nhwc(x, kw, kw, stride, pad)
        y = conv_fused(
            patches, p["w"], p["b"],
            gamma=p["gamma"], beta=p["beta"],
            negative_slope=None if is_last else 0.2,
            out_dtype=jnp.float32 if is_last else jnp.bfloat16,
        )
        x = y[:, :cout].reshape(N, Ho, Wo, cout)   # drop padded lanes once
        # TODO(synk): use_sigmoid=True branch not exercised (module default is False).
    return jnp.transpose(x, (0, 3, 1, 2))  # back to NCHW, f32


# --------------------------------- main ---------------------------------------

if __name__ == "__main__":
    key = jax.random.PRNGKey(0)
    k_in, k_par = jax.random.split(key)

    input_nc, ndf, n_layer = 4, 8, 3
    x = jax.random.normal(k_in, (2, input_nc, 16, 16), jnp.float32)  # NCHW like torch

    specs = make_layer_specs(input_nc, ndf=ndf, n_layer=n_layer)
    params = init_params(k_par, specs)
    prepared = prepare_params(params, specs)   # one-time layout/padding prep

    fwd = jax.jit(functools.partial(nlayer_discriminator_forward, specs=specs))
    out = jax.block_until_ready(fwd(x, prepared))

    # PatchGAN output: 16 -> 9 -> 5 -> 3 (stride 2,2,2) -> 4 -> 5 (stride 1,1), 1 channel
    assert out.shape == (2, 1, 5, 5), out.shape
    assert bool(jnp.all(jnp.isfinite(out)))
    print("KERNEL_OK")
</pallas_src>

<mosaic_0001>
module attributes {stable_mosaic.version = 11 : i64} {
  func.func @_conv_act_kernel(%arg0: i32, %arg1: memref<162x64xbf16, #tpu.memory_space<vmem>>, %arg2: memref<64x128xbf16, #tpu.memory_space<vmem>>, %arg3: memref<1x128xf32, #tpu.memory_space<vmem>>, %arg4: memref<162x128xbf16, #tpu.memory_space<vmem>>) attributes {dimension_semantics = [#tpu.dimension_semantics<parallel>], iteration_bounds = array<i64: 1>, scalar_prefetch = 0 : i64, scratch_operands = 0 : i64, tpu.core_type = #tpu.core_type<tc>, window_params = [{transform_indices = @transform_0, window_bounds = array<i64: 162, 64>}, {pipeline_mode = #tpu.pipeline_mode<synchronous>, transform_indices = @transform_1, window_bounds = array<i64: 64, 128>}, {pipeline_mode = #tpu.pipeline_mode<synchronous>, transform_indices = @transform_2, window_bounds = array<i64: 1, 128>}, {transform_indices = @transform_3, window_bounds = array<i64: 162, 128>}]} {
    %c0 = arith.constant 0 : index
    %c0_0 = arith.constant 0 : index
    %0 = vector.load %arg1[%c0, %c0_0] : memref<162x64xbf16, #tpu.memory_space<vmem>>, vector<162x64xbf16>
    %c0_1 = arith.constant 0 : index
    %c0_2 = arith.constant 0 : index
    %1 = vector.load %arg2[%c0_1, %c0_2] : memref<64x128xbf16, #tpu.memory_space<vmem>>, vector<64x128xbf16>
    %cst = arith.constant dense<0.000000e+00> : vector<162x128xf32>
    %2 = tpu.matmul %0, %1, %cst {dimension_numbers = #tpu.dot_dimension_numbers<[1], [0], [0], [1], [0, 0, 1, 1], [], []>} : vector<162x64xbf16>, vector<64x128xbf16>, vector<162x128xf32> -> vector<162x128xf32>
    %c0_3 = arith.constant 0 : index
    %c0_4 = arith.constant 0 : index
    %3 = vector.load %arg3[%c0_3, %c0_4] : memref<1x128xf32, #tpu.memory_space<vmem>>, vector<1x128xf32>
    %4 = vector.broadcast %3 : vector<1x128xf32> to vector<162x128xf32>
    %5 = arith.addf %2, %4 : vector<162x128xf32>
    %cst_5 = arith.constant 0.000000e+00 : f32
    %6 = vector.broadcast %cst_5 : f32 to vector<162x128xf32>
    %7 = arith.cmpf oge, %5, %6 : vector<162x128xf32>
    %cst_6 = arith.constant 2.000000e-01 : f32
    %8 = vector.broadcast %cst_6 : f32 to vector<162x128xf32>
    %9 = arith.mulf %8, %5 : vector<162x128xf32>
    %10 = arith.select %7, %5, %9 : vector<162x128xi1>, vector<162x128xf32>
    %11 = arith.truncf %10 : vector<162x128xf32> to vector<162x128xbf16>
    %c0_7 = arith.constant 0 : index
    %c0_8 = arith.constant 0 : index
    %12 = vector.load %arg4[%c0_7, %c0_8] : memref<162x128xbf16, #tpu.memory_space<vmem>>, vector<162x128xbf16>
    tpu.vector_store %arg4[%c0_7, %c0_8], %11 {strides = array<i32>} : memref<162x128xbf16, #tpu.memory_space<vmem>>, vector<162x128xbf16>,
    return
  }
  func.func @transform_0(%arg0: i32) -> (i32, i32) {
    %c0_i32 = arith.constant 0 : i32
    %c0_i32_0 = arith.constant 0 : i32
    return %arg0, %c0_i32 : i32, i32
  }
  func.func @transform_1(%arg0: i32) -> (i32, i32) {
    %c0_i32 = arith.constant 0 : i32
    %c0_i32_0 = arith.constant 0 : i32
    %c0_i32_1 = arith.constant 0 : i32
    return %c0_i32, %c0_i32_0 : i32, i32
  }
  func.func @transform_2(%arg0: i32) -> (i32, i32) {
    %c0_i32 = arith.constant 0 : i32
    %c0_i32_0 = arith.constant 0 : i32
    %c0_i32_1 = arith.constant 0 : i32
    return %c0_i32, %c0_i32_0 : i32, i32
  }
  func.func @transform_3(%arg0: i32) -> (i32, i32) {
    %c0_i32 = arith.constant 0 : i32
    %c0_i32_0 = arith.constant 0 : i32
    return %arg0, %c0_i32 : i32, i32
  }
}

module attributes {stable_mosaic.version = 11 : i64} {
  func.func @_conv_bn_act_kernel(%arg0: memref<50x128xbf16, #tpu.memory_space<vmem>>, %arg1: memref<128x128xbf16, #tpu.memory_space<vmem>>, %arg2: memref<1x128xf32, #tpu.memory_space<vmem>>, %arg3: memref<1x128xf32, #tpu.memory_space<vmem>>, %arg4: memref<1x128xf32, #tpu.memory_space<vmem>>, %arg5: memref<50x128xbf16, #tpu.memory_space<vmem>>) attributes {dimension_semantics = [], scalar_prefetch = 0 : i64, scratch_operands = 0 : i64, tpu.core_type = #tpu.core_type<tc>} {
    %c0 = arith.constant 0 : index
    %c0_0 = arith.constant 0 : index
    %0 = vector.load %arg0[%c0, %c0_0] : memref<50x128xbf16, #tpu.memory_space<vmem>>, vector<50x128xbf16>
    %c0_1 = arith.constant 0 : index
    %c0_2 = arith.constant 0 : index
    %1 = vector.load %arg1[%c0_1, %c0_2] : memref<128x128xbf16, #tpu.memory_space<vmem>>, vector<128x128xbf16>
    %cst = arith.constant dense<0.000000e+00> : vector<50x128xf32>
    %2 = tpu.matmul %0, %1, %cst {dimension_numbers = #tpu.dot_dimension_numbers<[1], [0], [0], [1], [0, 0, 1, 1], [], []>} : vector<50x128xbf16>, vector<128x128xbf16>, vector<50x128xf32> -> vector<50x128xf32>
    %c0_3 = arith.constant 0 : index
    %c0_4 = arith.constant 0 : index
    %3 = vector.load %arg2[%c0_3, %c0_4] : memref<1x128xf32, #tpu.memory_space<vmem>>, vector<1x128xf32>
    %4 = vector.broadcast %3 : vector<1x128xf32> to vector<50x128xf32>
    %5 = arith.addf %2, %4 : vector<50x128xf32>
    %cst_5 = arith.constant dense<0.000000e+00> : vector<128xf32>
    %6 = vector.multi_reduction <add>, %5, %cst_5 [0] : vector<50x128xf32> to vector<128xf32>
    %7 = vector.shape_cast %6 : vector<128xf32> to vector<1x128xf32>
    %cst_6 = arith.constant 5.000000e+01 : f32
    %8 = vector.broadcast %cst_6 : f32 to vector<1x128xf32>
    %9 = arith.divf %7, %8 : vector<1x128xf32>
    %10 = vector.broadcast %9 : vector<1x128xf32> to vector<50x128xf32>
    %11 = arith.subf %5, %10 : vector<50x128xf32>
    %12 = arith.mulf %11, %11 : vector<50x128xf32>
    %cst_7 = arith.constant dense<0.000000e+00> : vector<128xf32>
    %13 = vector.multi_reduction <add>, %12, %cst_7 [0] : vector<50x128xf32> to vector<128xf32>
    %14 = vector.shape_cast %13 : vector<128xf32> to vector<1x128xf32>
    %cst_8 = arith.constant 5.000000e+01 : f32
    %15 = vector.broadcast %cst_8 : f32 to vector<1x128xf32>
    %16 = arith.divf %14, %15 : vector<1x128xf32>
    %17 = vector.broadcast %9 : vector<1x128xf32> to vector<50x128xf32>
    %18 = arith.subf %5, %17 : vector<50x128xf32>
    %cst_9 = arith.constant 9.99999974E-6 : f32
    %19 = vector.broadcast %cst_9 : f32 to vector<1x128xf32>
    %20 = arith.addf %16, %19 : vector<1x128xf32>
    %21 = math.rsqrt %20 : vector<1x128xf32>
    %22 = vector.broadcast %21 : vector<1x128xf32> to vector<50x128xf32>
    %23 = arith.mulf %18, %22 : vector<50x128xf32>
    %c0_10 = arith.constant 0 : index
    %c0_11 = arith.constant 0 : index
    %24 = vector.load %arg3[%c0_10, %c0_11] : memref<1x128xf32, #tpu.memory_space<vmem>>, vector<1x128xf32>
    %25 = vector.broadcast %24 : vector<1x128xf32> to vector<50x128xf32>
    %26 = arith.mulf %23, %25 : vector<50x128xf32>
    %c0_12 = arith.constant 0 : index
    %c0_13 = arith.constant 0 : index
    %27 = vector.load %arg4[%c0_12, %c0_13] : memref<1x128xf32, #tpu.memory_space<vmem>>, vector<1x128xf32>
    %28 = vector.broadcast %27 : vector<1x128xf32> to vector<50x128xf32>
    %29 = arith.addf %26, %28 : vector<50x128xf32>
    %cst_14 = arith.constant 0.000000e+00 : f32
    %30 = vector.broadcast %cst_14 : f32 to vector<50x128xf32>
    %31 = arith.cmpf oge, %29, %30 : vector<50x128xf32>
    %cst_15 = arith.constant 2.000000e-01 : f32
    %32 = vector.broadcast %cst_15 : f32 to vector<50x128xf32>
    %33 = arith.mulf %32, %29 : vector<50x128xf32>
    %34 = arith.select %31, %29, %33 : vector<50x128xi1>, vector<50x128xf32>
    %35 = arith.truncf %34 : vector<50x128xf32> to vector<50x128xbf16>
    %c0_16 = arith.constant 0 : index
    %c0_17 = arith.constant 0 : index
    %36 = vector.load %arg5[%c0_16, %c0_17] : memref<50x128xbf16, #tpu.memory_space<vmem>>, vector<50x128xbf16>
    tpu.vector_store %arg5[%c0_16, %c0_17], %35 {strides = array<i32>} : memref<50x128xbf16, #tpu.memory_space<vmem>>, vector<50x128xbf16>,
    return
  }
}

module attributes {stable_mosaic.version = 11 : i64} {
  func.func @_conv_bn_act_kernel(%arg0: memref<18x256xbf16, #tpu.memory_space<vmem>>, %arg1: memref<256x128xbf16, #tpu.memory_space<vmem>>, %arg2: memref<1x128xf32, #tpu.memory_space<vmem>>, %arg3: memref<1x128xf32, #tpu.memory_space<vmem>>, %arg4: memref<1x128xf32, #tpu.memory_space<vmem>>, %arg5: memref<18x128xbf16, #tpu.memory_space<vmem>>) attributes {dimension_semantics = [], scalar_prefetch = 0 : i64, scratch_operands = 0 : i64, tpu.core_type = #tpu.core_type<tc>} {
    %c0 = arith.constant 0 : index
    %c0_0 = arith.constant 0 : index
    %0 = vector.load %arg0[%c0, %c0_0] : memref<18x256xbf16, #tpu.memory_space<vmem>>, vector<18x256xbf16>
    %c0_1 = arith.constant 0 : index
    %c0_2 = arith.constant 0 : index
    %1 = vector.load %arg1[%c0_1, %c0_2] : memref<256x128xbf16, #tpu.memory_space<vmem>>, vector<256x128xbf16>
    %cst = arith.constant dense<0.000000e+00> : vector<18x128xf32>
    %2 = tpu.matmul %0, %1, %cst {dimension_numbers = #tpu.dot_dimension_numbers<[1], [0], [0], [1], [0, 0, 1, 1], [], []>} : vector<18x256xbf16>, vector<256x128xbf16>, vector<18x128xf32> -> vector<18x128xf32>
    %c0_3 = arith.constant 0 : index
    %c0_4 = arith.constant 0 : index
    %3 = vector.load %arg2[%c0_3, %c0_4] : memref<1x128xf32, #tpu.memory_space<vmem>>, vector<1x128xf32>
    %4 = vector.broadcast %3 : vector<1x128xf32> to vector<18x128xf32>
    %5 = arith.addf %2, %4 : vector<18x128xf32>
    %cst_5 = arith.constant dense<0.000000e+00> : vector<128xf32>
    %6 = vector.multi_reduction <add>, %5, %cst_5 [0] : vector<18x128xf32> to vector<128xf32>
    %7 = vector.shape_cast %6 : vector<128xf32> to vector<1x128xf32>
    %cst_6 = arith.constant 1.800000e+01 : f32
    %8 = vector.broadcast %cst_6 : f32 to vector<1x128xf32>
    %9 = arith.divf %7, %8 : vector<1x128xf32>
    %10 = vector.broadcast %9 : vector<1x128xf32> to vector<18x128xf32>
    %11 = arith.subf %5, %10 : vector<18x128xf32>
    %12 = arith.mulf %11, %11 : vector<18x128xf32>
    %cst_7 = arith.constant dense<0.000000e+00> : vector<128xf32>
    %13 = vector.multi_reduction <add>, %12, %cst_7 [0] : vector<18x128xf32> to vector<128xf32>
    %14 = vector.shape_cast %13 : vector<128xf32> to vector<1x128xf32>
    %cst_8 = arith.constant 1.800000e+01 : f32
    %15 = vector.broadcast %cst_8 : f32 to vector<1x128xf32>
    %16 = arith.divf %14, %15 : vector<1x128xf32>
    %17 = vector.broadcast %9 : vector<1x128xf32> to vector<18x128xf32>
    %18 = arith.subf %5, %17 : vector<18x128xf32>
    %cst_9 = arith.constant 9.99999974E-6 : f32
    %19 = vector.broadcast %cst_9 : f32 to vector<1x128xf32>
    %20 = arith.addf %16, %19 : vector<1x128xf32>
    %21 = math.rsqrt %20 : vector<1x128xf32>
    %22 = vector.broadcast %21 : vector<1x128xf32> to vector<18x128xf32>
    %23 = arith.mulf %18, %22 : vector<18x128xf32>
    %c0_10 = arith.constant 0 : index
    %c0_11 = arith.constant 0 : index
    %24 = vector.load %arg3[%c0_10, %c0_11] : memref<1x128xf32, #tpu.memory_space<vmem>>, vector<1x128xf32>
    %25 = vector.broadcast %24 : vector<1x128xf32> to vector<18x128xf32>
    %26 = arith.mulf %23, %25 : vector<18x128xf32>
    %c0_12 = arith.constant 0 : index
    %c0_13 = arith.constant 0 : index
    %27 = vector.load %arg4[%c0_12, %c0_13] : memref<1x128xf32, #tpu.memory_space<vmem>>, vector<1x128xf32>
    %28 = vector.broadcast %27 : vector<1x128xf32> to vector<18x128xf32>
    %29 = arith.addf %26, %28 : vector<18x128xf32>
    %cst_14 = arith.constant 0.000000e+00 : f32
    %30 = vector.broadcast %cst_14 : f32 to vector<18x128xf32>
    %31 = arith.cmpf oge, %29, %30 : vector<18x128xf32>
    %cst_15 = arith.constant 2.000000e-01 : f32
    %32 = vector.broadcast %cst_15 : f32 to vector<18x128xf32>
    %33 = arith.mulf %32, %29 : vector<18x128xf32>
    %34 = arith.select %31, %29, %33 : vector<18x128xi1>, vector<18x128xf32>
    %35 = arith.truncf %34 : vector<18x128xf32> to vector<18x128xbf16>
    %c0_16 = arith.constant 0 : index
    %c0_17 = arith.constant 0 : index
    %36 = vector.load %arg5[%c0_16, %c0_17] : memref<18x128xbf16, #tpu.memory_space<vmem>>, vector<18x128xbf16>
    tpu.vector_store %arg5[%c0_16, %c0_17], %35 {strides = array<i32>} : memref<18x128xbf16, #tpu.memory_space<vmem>>, vector<18x128xbf16>,
    return
  }
}

module attributes {stable_mosaic.version = 11 : i64} {
  func.func @_conv_bn_act_kernel(%arg0: memref<32x512xbf16, #tpu.memory_space<vmem>>, %arg1: memref<512x128xbf16, #tpu.memory_space<vmem>>, %arg2: memref<1x128xf32, #tpu.memory_space<vmem>>, %arg3: memref<1x128xf32, #tpu.memory_space<vmem>>, %arg4: memref<1x128xf32, #tpu.memory_space<vmem>>, %arg5: memref<32x128xbf16, #tpu.memory_space<vmem>>) attributes {dimension_semantics = [], scalar_prefetch = 0 : i64, scratch_operands = 0 : i64, tpu.core_type = #tpu.core_type<tc>} {
    %c0 = arith.constant 0 : index
    %c0_0 = arith.constant 0 : index
    %0 = vector.load %arg0[%c0, %c0_0] : memref<32x512xbf16, #tpu.memory_space<vmem>>, vector<32x512xbf16>
    %c0_1 = arith.constant 0 : index
    %c0_2 = arith.constant 0 : index
    %1 = vector.load %arg1[%c0_1, %c0_2] : memref<512x128xbf16, #tpu.memory_space<vmem>>, vector<512x128xbf16>
    %cst = arith.constant dense<0.000000e+00> : vector<32x128xf32>
    %2 = tpu.matmul %0, %1, %cst {dimension_numbers = #tpu.dot_dimension_numbers<[1], [0], [0], [1], [0, 0, 1, 1], [], []>} : vector<32x512xbf16>, vector<512x128xbf16>, vector<32x128xf32> -> vector<32x128xf32>
    %c0_3 = arith.constant 0 : index
    %c0_4 = arith.constant 0 : index
    %3 = vector.load %arg2[%c0_3, %c0_4] : memref<1x128xf32, #tpu.memory_space<vmem>>, vector<1x128xf32>
    %4 = vector.broadcast %3 : vector<1x128xf32> to vector<32x128xf32>
    %5 = arith.addf %2, %4 : vector<32x128xf32>
    %cst_5 = arith.constant dense<0.000000e+00> : vector<128xf32>
    %6 = vector.multi_reduction <add>, %5, %cst_5 [0] : vector<32x128xf32> to vector<128xf32>
    %7 = vector.shape_cast %6 : vector<128xf32> to vector<1x128xf32>
    %cst_6 = arith.constant 3.200000e+01 : f32
    %8 = vector.broadcast %cst_6 : f32 to vector<1x128xf32>
    %9 = arith.divf %7, %8 : vector<1x128xf32>
    %10 = vector.broadcast %9 : vector<1x128xf32> to vector<32x128xf32>
    %11 = arith.subf %5, %10 : vector<32x128xf32>
    %12 = arith.mulf %11, %11 : vector<32x128xf32>
    %cst_7 = arith.constant dense<0.000000e+00> : vector<128xf32>
    %13 = vector.multi_reduction <add>, %12, %cst_7 [0] : vector<32x128xf32> to vector<128xf32>
    %14 = vector.shape_cast %13 : vector<128xf32> to vector<1x128xf32>
    %cst_8 = arith.constant 3.200000e+01 : f32
    %15 = vector.broadcast %cst_8 : f32 to vector<1x128xf32>
    %16 = arith.divf %14, %15 : vector<1x128xf32>
    %17 = vector.broadcast %9 : vector<1x128xf32> to vector<32x128xf32>
    %18 = arith.subf %5, %17 : vector<32x128xf32>
    %cst_9 = arith.constant 9.99999974E-6 : f32
    %19 = vector.broadcast %cst_9 : f32 to vector<1x128xf32>
    %20 = arith.addf %16, %19 : vector<1x128xf32>
    %21 = math.rsqrt %20 : vector<1x128xf32>
    %22 = vector.broadcast %21 : vector<1x128xf32> to vector<32x128xf32>
    %23 = arith.mulf %18, %22 : vector<32x128xf32>
    %c0_10 = arith.constant 0 : index
    %c0_11 = arith.constant 0 : index
    %24 = vector.load %arg3[%c0_10, %c0_11] : memref<1x128xf32, #tpu.memory_space<vmem>>, vector<1x128xf32>
    %25 = vector.broadcast %24 : vector<1x128xf32> to vector<32x128xf32>
    %26 = arith.mulf %23, %25 : vector<32x128xf32>
    %c0_12 = arith.constant 0 : index
    %c0_13 = arith.constant 0 : index
    %27 = vector.load %arg4[%c0_12, %c0_13] : memref<1x128xf32, #tpu.memory_space<vmem>>, vector<1x128xf32>
    %28 = vector.broadcast %27 : vector<1x128xf32> to vector<32x128xf32>
    %29 = arith.addf %26, %28 : vector<32x128xf32>
    %cst_14 = arith.constant 0.000000e+00 : f32
    %30 = vector.broadcast %cst_14 : f32 to vector<32x128xf32>
    %31 = arith.cmpf oge, %29, %30 : vector<32x128xf32>
    %cst_15 = arith.constant 2.000000e-01 : f32
    %32 = vector.broadcast %cst_15 : f32 to vector<32x128xf32>
    %33 = arith.mulf %32, %29 : vector<32x128xf32>
    %34 = arith.select %31, %29, %33 : vector<32x128xi1>, vector<32x128xf32>
    %35 = arith.truncf %34 : vector<32x128xf32> to vector<32x128xbf16>
    %c0_16 = arith.constant 0 : index
    %c0_17 = arith.constant 0 : index
    %36 = vector.load %arg5[%c0_16, %c0_17] : memref<32x128xbf16, #tpu.memory_space<vmem>>, vector<32x128xbf16>
    tpu.vector_store %arg5[%c0_16, %c0_17], %35 {strides = array<i32>} : memref<32x128xbf16, #tpu.memory_space<vmem>>, vector<32x128xbf16>,
    return
  }
}

module attributes {stable_mosaic.version = 11 : i64} {
  func.func @_conv_act_kernel(%arg0: i32, %arg1: memref<50x1024xbf16, #tpu.memory_space<vmem>>, %arg2: memref<1024x128xbf16, #tpu.memory_space<vmem>>, %arg3: memref<1x128xf32, #tpu.memory_space<vmem>>, %arg4: memref<50x128xf32, #tpu.memory_space<vmem>>) attributes {dimension_semantics = [#tpu.dimension_semantics<parallel>], iteration_bounds = array<i64: 1>, scalar_prefetch = 0 : i64, scratch_operands = 0 : i64, tpu.core_type = #tpu.core_type<tc>, window_params = [{transform_indices = @transform_0, window_bounds = array<i64: 50, 1024>}, {pipeline_mode = #tpu.pipeline_mode<synchronous>, transform_indices = @transform_1, window_bounds = array<i64: 1024, 128>}, {pipeline_mode = #tpu.pipeline_mode<synchronous>, transform_indices = @transform_2, window_bounds = array<i64: 1, 128>}, {transform_indices = @transform_3, window_bounds = array<i64: 50, 128>}]} {
    %c0 = arith.constant 0 : index
    %c0_0 = arith.constant 0 : index
    %0 = vector.load %arg1[%c0, %c0_0] : memref<50x1024xbf16, #tpu.memory_space<vmem>>, vector<50x1024xbf16>
    %c0_1 = arith.constant 0 : index
    %c0_2 = arith.constant 0 : index
    %1 = vector.load %arg2[%c0_1, %c0_2] : memref<1024x128xbf16, #tpu.memory_space<vmem>>, vector<1024x128xbf16>
    %cst = arith.constant dense<0.000000e+00> : vector<50x128xf32>
    %2 = tpu.matmul %0, %1, %cst {dimension_numbers = #tpu.dot_dimension_numbers<[1], [0], [0], [1], [0, 0, 1, 1], [], []>} : vector<50x1024xbf16>, vector<1024x128xbf16>, vector<50x128xf32> -> vector<50x128xf32>
    %c0_3 = arith.constant 0 : index
    %c0_4 = arith.constant 0 : index
    %3 = vector.load %arg3[%c0_3, %c0_4] : memref<1x128xf32, #tpu.memory_space<vmem>>, vector<1x128xf32>
    %4 = vector.broadcast %3 : vector<1x128xf32> to vector<50x128xf32>
    %5 = arith.addf %2, %4 : vector<50x128xf32>
    %c0_5 = arith.constant 0 : index
    %c0_6 = arith.constant 0 : index
    %6 = vector.load %arg4[%c0_5, %c0_6] : memref<50x128xf32, #tpu.memory_space<vmem>>, vector<50x128xf32>
    tpu.vector_store %arg4[%c0_5, %c0_6], %5 {strides = array<i32>} : memref<50x128xf32, #tpu.memory_space<vmem>>, vector<50x128xf32>,
    return
  }
  func.func @transform_0(%arg0: i32) -> (i32, i32) {
    %c0_i32 = arith.constant 0 : i32
    %c0_i32_0 = arith.constant 0 : i32
    return %arg0, %c0_i32 : i32, i32
  }
  func.func @transform_1(%arg0: i32) -> (i32, i32) {
    %c0_i32 = arith.constant 0 : i32
    %c0_i32_0 = arith.constant 0 : i32
    %c0_i32_1 = arith.constant 0 : i32
    return %c0_i32, %c0_i32_0 : i32, i32
  }
  func.func @transform_2(%arg0: i32) -> (i32, i32) {
    %c0_i32 = arith.constant 0 : i32
    %c0_i32_0 = arith.constant 0 : i32
    %c0_i32_1 = arith.constant 0 : i32
    return %c0_i32, %c0_i32_0 : i32, i32
  }
  func.func @transform_3(%arg0: i32) -> (i32, i32) {
    %c0_i32 = arith.constant 0 : i32
    %c0_i32_0 = arith.constant 0 : i32
    return %arg0, %c0_i32 : i32, i32
  }
}

</mosaic_0001>

<llo_original>
// kernel: nlayer_discriminator_forward.5
$region0: #{nlayer_discriminator_forward.5}
  #allocation0 [shape = 'u32[]', space=smem, size = 0x4, offset = 0x4, fixed_abs, tag = 'smem constant byte address 0x4 - core index']
  #allocation1 [shape = 'u32[72,128]{1,0:T(1,128)}', space=vmem, size = 0x9000, scoped, tag = 'internal scratch']
  %s0 = inlined_call_operand.vmem [shape: bf16[162,64], index: 0, kind: input, shape index: {}]
  %s1 = inlined_call_operand.vmem [shape: bf16[64,128], index: 1, kind: input, shape index: {}]
  %s2 = inlined_call_operand.vmem [shape: f32[1,128], index: 2, kind: input, shape index: {}]
  %s3 = inlined_call_operand.vmem [shape: bf16[162,128], index: 3, kind: output, shape index: {}]
  %s4 = sld [smem:[#allocation0]]
  $region22: #{nlayer_discriminator_forward.5} parent=0
    _
  %s6 = ssub.s32 1, %s4
  %s7 = scalar_select 0, %s6, %s4
  // Predicated region
  $region2: #{nlayer_discriminator_forward.5} parent=0 // pred_check
    _
  $region3: #{nlayer_discriminator_forward.5} parent=0 // pred_check_branch
    %9 = sbr.rel (0) target = $region5
  $region4: #{nlayer_discriminator_forward.5} parent=0 // pred_region
    _
  $region5: #{nlayer_discriminator_forward.5} parent=0 // pred_fallthru
    _
  // Predicated region
  $region6: #{nlayer_discriminator_forward.5} parent=0 // pred_check
    _
  $region7: #{nlayer_discriminator_forward.5} parent=0 // pred_check_branch
    %11 = sbr.rel (0) target = $region9
  $region8: #{nlayer_discriminator_forward.5} parent=0 // pred_region
    _
  $region9: #{nlayer_discriminator_forward.5} parent=0 // pred_fallthru
    _
  // Predicated region
  $region10: #{nlayer_discriminator_forward.5} parent=0 // pred_check
    _
  $region11: #{nlayer_discriminator_forward.5} parent=0 // pred_check_branch
    %13 = sbr.rel (0) target = $region13
  $region12: #{nlayer_discriminator_forward.5} parent=0 // pred_region
    _
  $region13: #{nlayer_discriminator_forward.5} parent=0 // pred_fallthru
    _
  %v15 = vld [vmem:[%s0] sm:$0xf]
  %v16 = vld [vmem:[%s0 + $0x4] sm:$0xf]
  %v17 = vld [vmem:[%s0 + $0x8] sm:$0xf]
  %v18 = vld [vmem:[%s0 + $0xc] sm:$0xf]
  %v19 = vld [vmem:[%s0 + $0x10] sm:$0xf]
  %v20 = vld [vmem:[%s0 + $0x14] sm:$0xf]
  %v21 = vld [vmem:[%s0 + $0x18] sm:$0xf]
  %v22 = vld [vmem:[%s0 + $0x1c] sm:$0xf]
  %v23 = vld [vmem:[%s0 + $0x20] sm:$0xf]
  %v24 = vld [vmem:[%s0 + $0x24] sm:$0xf]
  %v25 = vld [vmem:[%s0 + $0x28] sm:$0xf]
  %v26 = vld [vmem:[%s0 + $0x2c] sm:$0xf]
  %v27 = vld [vmem:[%s0 + $0x30] sm:$0xf]
  %v28 = vld [vmem:[%s0 + $0x34] sm:$0xf]
  %v29 = vld [vmem:[%s0 + $0x38] sm:$0xf]
  %v30 = vld [vmem:[%s0 + $0x3c] sm:$0xf]
  %v31 = vld [vmem:[%s0 + $0x40] sm:$0xf]
  %v32 = vld [vmem:[%s0 + $0x44] sm:$0xf]
  %v33 = vld [vmem:[%s0 + $0x48] sm:$0xf]
  %v34 = vld [vmem:[%s0 + $0x4c] sm:$0xf]
  %v35 = vld [vmem:[%s0 + $0x50] sm:$0x1]
  %v36 = vld [vmem:[%s1] sm:$0xf]
  %v37 = vld [vmem:[%s1 + $0x4] sm:$0xf]
  %v38 = vld [vmem:[%s1 + $0x8] sm:$0xf]
  %v39 = vld [vmem:[%s1 + $0xc] sm:$0xf]
  %v40 = vld [vmem:[%s1 + $0x10] sm:$0xf]
  %v41 = vld [vmem:[%s1 + $0x14] sm:$0xf]
  %v42 = vld [vmem:[%s1 + $0x18] sm:$0xf]
  %v43 = vld [vmem:[%s1 + $0x1c] sm:$0xf]
  %v44 = vld [vmem:[%s2] sm:$0x1]
  %v46 = vperm.slane %v44, 0
  %v69 = vunpack.c.l.b16 %v15
  %v70 = vunpack.c.l.b16 %v16
  %v71 = vunpack.c.l.b16 %v17
  %v72 = vunpack.c.l.b16 %v18
  %v73 = vunpack.c.l.b16 %v19
  %v74 = vunpack.c.l.b16 %v20
  %v75 = vunpack.c.l.b16 %v21
  %v76 = vunpack.c.l.b16 %v22
  %v77 = vunpack.c.l.b16 %v23
  %v78 = vunpack.c.l.b16 %v24
  %v79 = vunpack.c.l.b16 %v25
  %v80 = vunpack.c.l.b16 %v26
  %v81 = vunpack.c.l.b16 %v27
  %v82 = vunpack.c.l.b16 %v28
  %v83 = vunpack.c.l.b16 %v29
  %v84 = vunpack.c.l.b16 %v30
  %v85 = vunpack.c.l.b16 %v31
  %v86 = vunpack.c.l.b16 %v32
  %v87 = vunpack.c.l.b16 %v33
  %v88 = vunpack.c.l.b16 %v34
  %v89 = vunpack.c.l.b16 %v35
  %v90 = vpack.c.b16 %v70, %v69
  %v91 = vpack.c.b16 %v72, %v71
  %v92 = vpack.c.b16 %v74, %v73
  %v93 = vpack.c.b16 %v76, %v75
  %v94 = vpack.c.b16 %v78, %v77
  %v95 = vpack.c.b16 %v80, %v79
  %v96 = vpack.c.b16 %v82, %v81
  %v97 = vpack.c.b16 %v84, %v83
  %v98 = vpack.c.b16 %v86, %v85
  %v99 = vpack.c.b16 %v88, %v87
  %v100 = vpack.c.b16 %v89, %v89
  %v109 = vunpack.c.l.b16 %v36
  %v110 = vunpack.c.l.b16 %v37
  %v111 = vunpack.c.l.b16 %v38
  %v112 = vunpack.c.l.b16 %v39
  %v113 = vunpack.c.l.b16 %v40
  %v114 = vunpack.c.l.b16 %v41
  %v115 = vunpack.c.l.b16 %v42
  %v116 = vunpack.c.l.b16 %v43
  %v117 = vpack.c.b16 %v110, %v109
  %v118 = vpack.c.b16 %v112, %v111
  %v119 = vpack.c.b16 %v114, %v113
  %v120 = vpack.c.b16 %v116, %v115
  %vm125 = vcmask 523264
  %v127 = vsel %vm125, %v90, 0
  %v130 = vsel %vm125, %v91, 0
  %v133 = vsel %vm125, %v92, 0
  %v136 = vsel %vm125, %v93, 0
  %v139 = vsel %vm125, %v94, 0
  %v142 = vsel %vm125, %v95, 0
  %v145 = vsel %vm125, %v96, 0
  %v148 = vsel %vm125, %v97, 0
  %v151 = vsel %vm125, %v98, 0
  %v154 = vsel %vm125, %v99, 0
  %v157 = vsel %vm125, %v100, 0
  %159 = vmatpush.bf16.msra.mxu0 0
  %160 = vmatpush.bf16.msra.mxu0 0
  %161 = vmatpush.bf16.msra.mxu0 0
  %162 = vmatpush.bf16.msra.mxu0 0
  %163 = vmatpush.bf16.msra.mxu0 %v120
  %164 = vmatpush.bf16.msra.mxu0 %v119
  %165 = vmatpush.bf16.msra.mxu0 %v118
  %166 = vmatpush.bf16.msra.mxu0 %v117
  %167 = vmatmul.bf16.gmra.mxu0 %v127
  %v168 = vpop.f32.mrf.mxu0
  %v169 = vadd.f32 %v46, %v168
  %v170 = vpop.f32.mrf.mxu0
  %v171 = vadd.f32 %v46, %v170
  %172 = vmatmul.bf16.gmra.mxu0 %v130
  %v173 = vpop.f32.mrf.mxu0
  %v174 = vadd.f32 %v46, %v173
  %v175 = vpop.f32.mrf.mxu0
  %v176 = vadd.f32 %v46, %v175
  %177 = vmatmul.bf16.gmra.mxu0 %v133
  %v178 = vpop.f32.mrf.mxu0
  %v179 = vadd.f32 %v46, %v178
  %v180 = vpop.f32.mrf.mxu0
  %v181 = vadd.f32 %v46, %v180
  %182 = vmatmul.bf16.gmra.mxu0 %v136
  %v183 = vpop.f32.mrf.mxu0
  %v184 = vadd.f32 %v46, %v183
  %v185 = vpop.f32.mrf.mxu0
  %v186 = vadd.f32 %v46, %v185
  %187 = vmatmul.bf16.gmra.mxu0 %v139
  %v188 = vpop.f32.mrf.mxu0
  %v189 = vadd.f32 %v46, %v188
  %v190 = vpop.f32.mrf.mxu0
  %v191 = vadd.f32 %v46, %v190
  %192 = vmatmul.bf16.gmra.mxu0 %v142
  %v193 = vpop.f32.mrf.mxu0
  %v194 = vadd.f32 %v46, %v193
  %v195 = vpop.f32.mrf.mxu0
  %v196 = vadd.f32 %v46, %v195
  %197 = vmatmul.bf16.gmra.mxu0 %v145
  %v198 = vpop.f32.mrf.mxu0
  %v199 = vadd.f32 %v46, %v198
  %v200 = vpop.f32.mrf.mxu0
  %v201 = vadd.f32 %v46, %v200
  %202 = vmatmul.bf16.gmra.mxu0 %v148
  %v203 = vpop.f32.mrf.mxu0
  %v204 = vadd.f32 %v46, %v203
  %v205 = vpop.f32.mrf.mxu0
  %v206 = vadd.f32 %v46, %v205
  %207 = vmatmul.bf16.gmra.mxu0 %v151
  %v208 = vpop.f32.mrf.mxu0
  %v209 = vadd.f32 %v46, %v208
  %v210 = vpop.f32.mrf.mxu0
  %v211 = vadd.f32 %v46, %v210
  %212 = vmatmul.bf16.gmra.mxu0 %v154
  %v213 = vpop.f32.mrf.mxu0
  %v214 = vadd.f32 %v46, %v213
  %v215 = vpop.f32.mrf.mxu0
  %v216 = vadd.f32 %v46, %v215
  %217 = vmatmul.bf16.gmra.mxu0 %v157
  %v218 = vpop.f32.mrf.mxu0
  %v219 = vadd.f32 %v46, %v218
  %v220 = vpop.f32.mrf.mxu0
  %221 = vdwg.mxu0
  %vm222 = vcmp.ge.f32.partialorder %v169, 0.0
  %vm223 = vcmp.ge.f32.partialorder %v171, 0.0
  %vm224 = vcmp.ge.f32.partialorder %v174, 0.0
  %vm225 = vcmp.ge.f32.partialorder %v176, 0.0
  %vm226 = vcmp.ge.f32.partialorder %v179, 0.0
  %vm227 = vcmp.ge.f32.partialorder %v181, 0.0
  %vm228 = vcmp.ge.f32.partialorder %v184, 0.0
  %vm229 = vcmp.ge.f32.partialorder %v186, 0.0
  %vm230 = vcmp.ge.f32.partialorder %v189, 0.0
  %vm231 = vcmp.ge.f32.partialorder %v191, 0.0
  %vm232 = vcmp.ge.f32.partialorder %v194, 0.0
  %vm233 = vcmp.ge.f32.partialorder %v196, 0.0
  %vm234 = vcmp.ge.f32.partialorder %v199, 0.0
  %vm235 = vcmp.ge.f32.partialorder %v201, 0.0
  %vm236 = vcmp.ge.f32.partialorder %v204, 0.0
  %vm237 = vcmp.ge.f32.partialorder %v206, 0.0
  %vm238 = vcmp.ge.f32.partialorder %v209, 0.0
  %vm239 = vcmp.ge.f32.partialorder %v211, 0.0
  %vm240 = vcmp.ge.f32.partialorder %v214, 0.0
  %vm241 = vcmp.ge.f32.partialorder %v216, 0.0
  %vm242 = vcmp.ge.f32.partialorder %v219, 0.0
  %v243 = vmul.f32 %v169, 0.2
  %v244 = vmul.f32 %v171, 0.2
  %v245 = vmul.f32 %v174, 0.2
  %v246 = vmul.f32 %v176, 0.2
  %v247 = vmul.f32 %v179, 0.2
  %v248 = vmul.f32 %v181, 0.2
  %v249 = vmul.f32 %v184, 0.2
  %v250 = vmul.f32 %v186, 0.2
  %v251 = vmul.f32 %v189, 0.2
  %v252 = vmul.f32 %v191, 0.2
  %v253 = vmul.f32 %v194, 0.2
  %v254 = vmul.f32 %v196, 0.2
  %v255 = vmul.f32 %v199, 0.2
  %v256 = vmul.f32 %v201, 0.2
  %v257 = vmul.f32 %v204, 0.2
  %v258 = vmul.f32 %v206, 0.2
  %v259 = vmul.f32 %v209, 0.2
  %v260 = vmul.f32 %v211, 0.2
  %v261 = vmul.f32 %v214, 0.2
  %v262 = vmul.f32 %v216, 0.2
  %v263 = vmul.f32 %v219, 0.2
  %v264 = vsel %vm222, %v169, %v243
  %v265 = vsel %vm223, %v171, %v244
  %v266 = vsel %vm224, %v174, %v245
  %v267 = vsel %vm225, %v176, %v246
  %v268 = vsel %vm226, %v179, %v247
  %v269 = vsel %vm227, %v181, %v248
  %v270 = vsel %vm228, %v184, %v249
  %v271 = vsel %vm229, %v186, %v250
  %v272 = vsel %vm230, %v189, %v251
  %v273 = vsel %vm231, %v191, %v252
  %v274 = vsel %vm232, %v194, %v253
  %v275 = vsel %vm233, %v196, %v254
  %v276 = vsel %vm234, %v199, %v255
  %v277 = vsel %vm235, %v201, %v256
  %v278 = vsel %vm236, %v204, %v257
  %v279 = vsel %vm237, %v206, %v258
  %v280 = vsel %vm238, %v209, %v259
  %v281 = vsel %vm239, %v211, %v260
  %v282 = vsel %vm240, %v214, %v261
  %v283 = vsel %vm241, %v216, %v262
  %v284 = vsel %vm242, %v219, %v263
  %v285 = vpack.c.bf16 %v264, %v264
  %v286 = vpack.c.bf16 %v265, %v265
  %v287 = vpack.c.bf16 %v266, %v266
  %v288 = vpack.c.bf16 %v267, %v267
  %v289 = vpack.c.bf16 %v268, %v268
  %v290 = vpack.c.bf16 %v269, %v269
  %v291 = vpack.c.bf16 %v270, %v270
  %v292 = vpack.c.bf16 %v271, %v271
  %v293 = vpack.c.bf16 %v272, %v272
  %v294 = vpack.c.bf16 %v273, %v273
  %v295 = vpack.c.bf16 %v274, %v274
  %v296 = vpack.c.bf16 %v275, %v275
  %v297 = vpack.c.bf16 %v276, %v276
  %v298 = vpack.c.bf16 %v277, %v277
  %v299 = vpack.c.bf16 %v278, %v278
  %v300 = vpack.c.bf16 %v279, %v279
  %v301 = vpack.c.bf16 %v280, %v280
  %v302 = vpack.c.bf16 %v281, %v281
  %v303 = vpack.c.bf16 %v282, %v282
  %v304 = vpack.c.bf16 %v283, %v283
  %v305 = vpack.c.bf16 %v284, %v284
  %306 = vst [vmem:[%s3] sm:$0xf] %v285
  %307 = vst [vmem:[%s3 + $0x4] sm:$0xf] %v286
  %308 = vst [vmem:[%s3 + $0x8] sm:$0xf] %v287
  %309 = vst [vmem:[%s3 + $0xc] sm:$0xf] %v288
  %310 = vst [vmem:[%s3 + $0x10] sm:$0xf] %v289
  %311 = vst [vmem:[%s3 + $0x14] sm:$0xf] %v290
  %312 = vst [vmem:[%s3 + $0x18] sm:$0xf] %v291
  %313 = vst [vmem:[%s3 + $0x1c] sm:$0xf] %v292
  %314 = vst [vmem:[%s3 + $0x20] sm:$0xf] %v293
  %315 = vst [vmem:[%s3 + $0x24] sm:$0xf] %v294
  %316 = vst [vmem:[%s3 + $0x28] sm:$0xf] %v295
  %317 = vst [vmem:[%s3 + $0x2c] sm:$0xf] %v296
  %318 = vst [vmem:[%s3 + $0x30] sm:$0xf] %v297
  %319 = vst [vmem:[%s3 + $0x34] sm:$0xf] %v298
  %320 = vst [vmem:[%s3 + $0x38] sm:$0xf] %v299
  %321 = vst [vmem:[%s3 + $0x3c] sm:$0xf] %v300
  %322 = vst [vmem:[%s3 + $0x40] sm:$0xf] %v301
  %323 = vst [vmem:[%s3 + $0x44] sm:$0xf] %v302
  %324 = vst [vmem:[%s3 + $0x48] sm:$0xf] %v303
  %325 = vst [vmem:[%s3 + $0x4c] sm:$0xf] %v304
  %326 = vst [vmem:[%s3 + $0x50] sm:$0x1] %v305
  // Predicated region
  $region14: #{nlayer_discriminator_forward.5} parent=0 // pred_check
    _
  $region15: #{nlayer_discriminator_forward.5} parent=0 // pred_check_branch
    %328 = sbr.rel (0) target = $region17
  $region16: #{nlayer_discriminator_forward.5} parent=0 // pred_region
    _
  $region17: #{nlayer_discriminator_forward.5} parent=0 // pred_fallthru
    _
  // Predicated region
  $region18: #{nlayer_discriminator_forward.5} parent=0 // pred_check
    _
  $region19: #{nlayer_discriminator_forward.5} parent=0 // pred_check_branch
    %330 = sbr.rel (0) target = $region21
  $region20: #{nlayer_discriminator_forward.5} parent=0 // pred_region
    _
  $region21: #{nlayer_discriminator_forward.5} parent=0 // pred_fallthru
    _

// kernel: nlayer_discriminator_forward.6
$region0: #{nlayer_discriminator_forward.6}
  #allocation0 [shape = 'u32[]', space=smem, size = 0x4, offset = 0x4, fixed_abs, tag = 'smem constant byte address 0x4 - core index']
  #allocation1 [shape = 'u32[72,128]{1,0:T(1,128)}', space=vmem, size = 0x9000, scoped, tag = 'internal scratch']
  %s0 = inlined_call_operand.vmem [shape: bf16[50,128], index: 0, kind: input, shape index: {}]
  %s1 = inlined_call_operand.vmem [shape: bf16[128,128], index: 1, kind: input, shape index: {}]
  %s2 = inlined_call_operand.vmem [shape: f32[1,128], index: 2, kind: input, shape index: {}]
  %s3 = inlined_call_operand.vmem [shape: f32[1,128], index: 3, kind: input, shape index: {}]
  %s4 = inlined_call_operand.vmem [shape: f32[1,128], index: 4, kind: input, shape index: {}]
  %s5 = inlined_call_operand.vmem [shape: bf16[50,128], index: 5, kind: output, shape index: {}]
  %s6 = sld [smem:[#allocation0]]
  $region30: #{nlayer_discriminator_forward.6} parent=0
    _
  %s8 = ssub.s32 1, %s6
  %s9 = scalar_select 0, %s8, %s6
  // Predicated region
  $region2: #{nlayer_discriminator_forward.6} parent=0 // pred_check
    _
  $region3: #{nlayer_discriminator_forward.6} parent=0 // pred_check_branch
    %11 = sbr.rel (0) target = $region5
  $region4: #{nlayer_discriminator_forward.6} parent=0 // pred_region
    _
  $region5: #{nlayer_discriminator_forward.6} parent=0 // pred_fallthru
    _
  // Predicated region
  $region6: #{nlayer_discriminator_forward.6} parent=0 // pred_check
    _
  $region7: #{nlayer_discriminator_forward.6} parent=0 // pred_check_branch
    %13 = sbr.rel (0) target = $region9
  $region8: #{nlayer_discriminator_forward.6} parent=0 // pred_region
    _
  $region9: #{nlayer_discriminator_forward.6} parent=0 // pred_fallthru
    _
  // Predicated region
  $region10: #{nlayer_discriminator_forward.6} parent=0 // pred_check
    _
  $region11: #{nlayer_discriminator_forward.6} parent=0 // pred_check_branch
    %15 = sbr.rel (0) target = $region13
  $region12: #{nlayer_discriminator_forward.6} parent=0 // pred_region
    _
  $region13: #{nlayer_discriminator_forward.6} parent=0 // pred_fallthru
    _
  // Predicated region
  $region14: #{nlayer_discriminator_forward.6} parent=0 // pred_check
    _
  $region15: #{nlayer_discriminator_forward.6} parent=0 // pred_check_branch
    %17 = sbr.rel (0) target = $region17
  $region16: #{nlayer_discriminator_forward.6} parent=0 // pred_region
    _
  $region17: #{nlayer_discriminator_forward.6} parent=0 // pred_fallthru
    _
  // Predicated region
  $region18: #{nlayer_discriminator_forward.6} parent=0 // pred_check
    _
  $region19: #{nlayer_discriminator_forward.6} parent=0 // pred_check_branch
    %19 = sbr.rel (0) target = $region21
  $region20: #{nlayer_discriminator_forward.6} parent=0 // pred_region
    _
  $region21: #{nlayer_discriminator_forward.6} parent=0 // pred_fallthru
    _
  %v20 = vld [vmem:[%s0] sm:$0xf]
  %v21 = vld [vmem:[%s0 + $0x4] sm:$0xf]
  %v22 = vld [vmem:[%s0 + $0x8] sm:$0xf]
  %v23 = vld [vmem:[%s0 + $0xc] sm:$0xf]
  %v24 = vld [vmem:[%s0 + $0x10] sm:$0xf]
  %v25 = vld [vmem:[%s0 + $0x14] sm:$0xf]
  %v26 = vld [vmem:[%s0 + $0x18] sm:$0x1]
  %v27 = vld [vmem:[%s1] sm:$0xf]
  %v28 = vld [vmem:[%s1 + $0x4] sm:$0xf]
  %v29 = vld [vmem:[%s1 + $0x8] sm:$0xf]
  %v30 = vld [vmem:[%s1 + $0xc] sm:$0xf]
  %v31 = vld [vmem:[%s1 + $0x10] sm:$0xf]
  %v32 = vld [vmem:[%s1 + $0x14] sm:$0xf]
  %v33 = vld [vmem:[%s1 + $0x18] sm:$0xf]
  %v34 = vld [vmem:[%s1 + $0x1c] sm:$0xf]
  %v35 = vld [vmem:[%s1 + $0x20] sm:$0xf]
  %v36 = vld [vmem:[%s1 + $0x24] sm:$0xf]
  %v37 = vld [vmem:[%s1 + $0x28] sm:$0xf]
  %v38 = vld [vmem:[%s1 + $0x2c] sm:$0xf]
  %v39 = vld [vmem:[%s1 + $0x30] sm:$0xf]
  %v40 = vld [vmem:[%s1 + $0x34] sm:$0xf]
  %v41 = vld [vmem:[%s1 + $0x38] sm:$0xf]
  %v42 = vld [vmem:[%s1 + $0x3c] sm:$0xf]
  %v43 = vld [vmem:[%s2] sm:$0x1]
  %v45 = vperm.slane %v43, 0
  %v54 = vunpack.c.l.b16 %v20
  %v55 = vunpack.c.l.b16 %v21
  %v56 = vunpack.c.l.b16 %v22
  %v57 = vunpack.c.l.b16 %v23
  %v58 = vunpack.c.l.b16 %v24
  %v59 = vunpack.c.l.b16 %v25
  %v60 = vunpack.c.l.b16 %v26
  %v61 = vpack.c.b16 %v55, %v54
  %v62 = vpack.c.b16 %v57, %v56
  %v63 = vpack.c.b16 %v59, %v58
  %v64 = vpack.c.b16 %v60, %v60
  %v85 = vunpack.c.l.b16 %v27
  %v86 = vunpack.c.l.b16 %v28
  %v87 = vunpack.c.l.b16 %v29
  %v88 = vunpack.c.l.b16 %v30
  %v89 = vunpack.c.l.b16 %v31
  %v90 = vunpack.c.l.b16 %v32
  %v91 = vunpack.c.l.b16 %v33
  %v92 = vunpack.c.l.b16 %v34
  %v93 = vunpack.c.l.b16 %v35
  %v94 = vunpack.c.l.b16 %v36
  %v95 = vunpack.c.l.b16 %v37
  %v96 = vunpack.c.l.b16 %v38
  %v97 = vunpack.c.l.b16 %v39
  %v98 = vunpack.c.l.b16 %v40
  %v99 = vunpack.c.l.b16 %v41
  %v100 = vunpack.c.l.b16 %v42
  %v101 = vpack.c.b16 %v86, %v85
  %v102 = vpack.c.b16 %v88, %v87
  %v103 = vpack.c.b16 %v90, %v89
  %v104 = vpack.c.b16 %v92, %v91
  %v105 = vpack.c.b16 %v94, %v93
  %v106 = vpack.c.b16 %v96, %v95
  %v107 = vpack.c.b16 %v98, %v97
  %v108 = vpack.c.b16 %v100, %v99
  %117 = vmatpush.bf16.msra.mxu0 %v108
  %118 = vmatpush.bf16.msra.mxu0 %v107
  %119 = vmatpush.bf16.msra.mxu0 %v106
  %120 = vmatpush.bf16.msra.mxu0 %v105
  %121 = vmatpush.bf16.msra.mxu0 %v104
  %122 = vmatpush.bf16.msra.mxu0 %v103
  %123 = vmatpush.bf16.msra.mxu0 %v102
  %124 = vmatpush.bf16.msra.mxu0 %v101
  %125 = vmatmul.bf16.gmra.mxu0 %v61
  %v126 = vpop.f32.mrf.mxu0
  %v127 = vadd.f32 %v45, %v126
  %v128 = vpop.f32.mrf.mxu0
  %v129 = vadd.f32 %v45, %v128
  %130 = vmatmul.bf16.gmra.mxu0 %v62
  %v131 = vpop.f32.mrf.mxu0
  %v132 = vadd.f32 %v45, %v131
  %v133 = vpop.f32.mrf.mxu0
  %v134 = vadd.f32 %v45, %v133
  %135 = vmatmul.bf16.gmra.mxu0 %v63
  %v136 = vpop.f32.mrf.mxu0
  %v137 = vadd.f32 %v45, %v136
  %v138 = vpop.f32.mrf.mxu0
  %v139 = vadd.f32 %v45, %v138
  %140 = vmatmul.bf16.gmra.mxu0 %v64
  %v141 = vpop.f32.mrf.mxu0
  %v142 = vadd.f32 %v45, %v141
  %v143 = vpop.f32.mrf.mxu0
  %144 = vdwg.mxu0
  %v145 = vadd.f32 %v127, %v129
  %v146 = vadd.f32 %v145, %v132
  %v147 = vadd.f32 %v146, %v134
  %v148 = vadd.f32 %v147, %v137
  %v149 = vadd.f32 %v148, %v139
  %vm150 = vcmask 1041408
  %v151 = vsel %vm150, %v142, 0.0
  %v152 = vadd.f32 %v149, %v151
  %v153 = vrot.slane %v152, 4
  %v154 = vadd.f32 %v152, %v153
  %v155 = vrot.slane %v154, 2
  %v156 = vadd.f32 %v154, %v155
  %v157 = vrot.slane %v156, 1
  %v158 = vadd.f32 %v156, %v157
  %v159 = vrcp.pop 50.0
  %v160 = vmul.f32 50.0, %v159
  %v161 = vsub.f32 1.0, %v160
  %v162 = vmul.f32 %v159, %v161
  %v163 = vadd.f32 %v159, %v162
  %vm164 = vweird.f32 %v159
  %v165 = vsel %vm164, %v159, %v163
  %v166 = vmul.f32 %v158, %v165
  %v167 = vsub.f32 %v127, %v166
  %v168 = vsub.f32 %v129, %v166
  %v169 = vsub.f32 %v132, %v166
  %v170 = vsub.f32 %v134, %v166
  %v171 = vsub.f32 %v137, %v166
  %v172 = vsub.f32 %v139, %v166
  %v173 = vsub.f32 %v142, %v166
  %v174 = vmul.f32 %v167, %v167
  %v175 = vmul.f32 %v168, %v168
  %v176 = vmul.f32 %v169, %v169
  %v177 = vmul.f32 %v170, %v170
  %v178 = vmul.f32 %v171, %v171
  %v179 = vmul.f32 %v172, %v172
  %v180 = vmul.f32 %v173, %v173
  %v181 = vadd.f32 %v174, %v175
  %v182 = vadd.f32 %v181, %v176
  %v183 = vadd.f32 %v182, %v177
  %v184 = vadd.f32 %v183, %v178
  %v185 = vadd.f32 %v184, %v179
  %v186 = vsel %vm150, %v180, 0.0
  %v187 = vadd.f32 %v185, %v186
  %v188 = vrot.slane %v187, 4
  %v189 = vadd.f32 %v187, %v188
  %v190 = vrot.slane %v189, 2
  %v191 = vadd.f32 %v189, %v190
  %v192 = vrot.slane %v191, 1
  %v193 = vadd.f32 %v191, %v192
  %v194 = vmul.f32 %v193, %v165
  %v195 = vadd.f32 %v194, 1e-05
  %v196 = vrsqrt.pop %v195
  %v197 = vmul.f32 %v196, %v195
  %v198 = vmul.f32 %v197, %v196
  %v199 = vmul.f32 0.5, %v198
  %v200 = vsub.f32 1.5, %v199
  %v201 = vmul.f32 %v196, %v200
  %vm202 = vweird.f32 %v195
  %vm203 = vweird.f32 %v196
  %vm204 = vmor %vm202, %vm203
  %v205 = vsel %vm204, %v196, %v201
  %v206 = vmul.f32 %v167, %v205
  %v207 = vmul.f32 %v168, %v205
  %v208 = vmul.f32 %v169, %v205
  %v209 = vmul.f32 %v170, %v205
  %v210 = vmul.f32 %v171, %v205
  %v211 = vmul.f32 %v172, %v205
  %v212 = vmul.f32 %v173, %v205
  %v213 = vld [vmem:[%s3] sm:$0x1]
  %v215 = vperm.slane %v213, 0
  %v217 = vmul.f32 %v206, %v215
  %v218 = vmul.f32 %v207, %v215
  %v219 = vmul.f32 %v208, %v215
  %v220 = vmul.f32 %v209, %v215
  %v221 = vmul.f32 %v210, %v215
  %v222 = vmul.f32 %v211, %v215
  %v223 = vmul.f32 %v212, %v215
  %v224 = vld [vmem:[%s4] sm:$0x1]
  %v226 = vperm.slane %v224, 0
  %v228 = vadd.f32 %v217, %v226
  %v229 = vadd.f32 %v218, %v226
  %v230 = vadd.f32 %v219, %v226
  %v231 = vadd.f32 %v220, %v226
  %v232 = vadd.f32 %v221, %v226
  %v233 = vadd.f32 %v222, %v226
  %v234 = vadd.f32 %v223, %v226
  %vm235 = vcmp.ge.f32.partialorder %v228, 0.0
  %vm236 = vcmp.ge.f32.partialorder %v229, 0.0
  %vm237 = vcmp.ge.f32.partialorder %v230, 0.0
  %vm238 = vcmp.ge.f32.partialorder %v231, 0.0
  %vm239 = vcmp.ge.f32.partialorder %v232, 0.0
  %vm240 = vcmp.ge.f32.partialorder %v233, 0.0
  %vm241 = vcmp.ge.f32.partialorder %v234, 0.0
  %v242 = vmul.f32 %v228, 0.2
  %v243 = vmul.f32 %v229, 0.2
  %v244 = vmul.f32 %v230, 0.2
  %v245 = vmul.f32 %v231, 0.2
  %v246 = vmul.f32 %v232, 0.2
  %v247 = vmul.f32 %v233, 0.2
  %v248 = vmul.f32 %v234, 0.2
  %v249 = vsel %vm235, %v228, %v242
  %v250 = vsel %vm236, %v229, %v243
  %v251 = vsel %vm237, %v230, %v244
  %v252 = vsel %vm238, %v231, %v245
  %v253 = vsel %vm239, %v232, %v246
  %v254 = vsel %vm240, %v233, %v247
  %v255 = vsel %vm241, %v234, %v248
  %v256 = vpack.c.bf16 %v249, %v249
  %v257 = vpack.c.bf16 %v250, %v250
  %v258 = vpack.c.bf16 %v251, %v251
  %v259 = vpack.c.bf16 %v252, %v252
  %v260 = vpack.c.bf16 %v253, %v253
  %v261 = vpack.c.bf16 %v254, %v254
  %v262 = vpack.c.bf16 %v255, %v255
  %263 = vst [vmem:[%s5] sm:$0xf] %v256
  %264 = vst [vmem:[%s5 + $0x4] sm:$0xf] %v257
  %265 = vst [vmem:[%s5 + $0x8] sm:$0xf] %v258
  %266 = vst [vmem:[%s5 + $0xc] sm:$0xf] %v259
  %267 = vst [vmem:[%s5 + $0x10] sm:$0xf] %v260
  %268 = vst [vmem:[%s5 + $0x14] sm:$0xf] %v261
  %269 = vst [vmem:[%s5 + $0x18] sm:$0x1] %v262
  // Predicated region
  $region22: #{nlayer_discriminator_forward.6} parent=0 // pred_check
    _
  $region23: #{nlayer_discriminator_forward.6} parent=0 // pred_check_branch
    %271 = sbr.rel (0) target = $region25
  $region24: #{nlayer_discriminator_forward.6} parent=0 // pred_region
    _
  $region25: #{nlayer_discriminator_forward.6} parent=0 // pred_fallthru
    _
  // Predicated region
  $region26: #{nlayer_discriminator_forward.6} parent=0 // pred_check
    _
  $region27: #{nlayer_discriminator_forward.6} parent=0 // pred_check_branch
    %273 = sbr.rel (0) target = $region29
  $region28: #{nlayer_discriminator_forward.6} parent=0 // pred_region
    _
  $region29: #{nlayer_discriminator_forward.6} parent=0 // pred_fallthru
    _

// kernel: nlayer_discriminator_forward.7
$region0: #{nlayer_discriminator_forward.7}
  #allocation0 [shape = 'u32[]', space=smem, size = 0x4, offset = 0x4, fixed_abs, tag = 'smem constant byte address 0x4 - core index']
  #allocation1 [shape = 'u32[72,128]{1,0:T(1,128)}', space=vmem, size = 0x9000, scoped, tag = 'internal scratch']
  %s0 = inlined_call_operand.vmem [shape: bf16[18,256], index: 0, kind: input, shape index: {}]
  %s1 = inlined_call_operand.vmem [shape: bf16[256,128], index: 1, kind: input, shape index: {}]
  %s2 = inlined_call_operand.vmem [shape: f32[1,128], index: 2, kind: input, shape index: {}]
  %s3 = inlined_call_operand.vmem [shape: f32[1,128], index: 3, kind: input, shape index: {}]
  %s4 = inlined_call_operand.vmem [shape: f32[1,128], index: 4, kind: input, shape index: {}]
  %s5 = inlined_call_operand.vmem [shape: bf16[18,128], index: 5, kind: output, shape index: {}]
  %s6 = sld [smem:[#allocation0]]
  $region30: #{nlayer_discriminator_forward.7} parent=0
    _
  %s8 = ssub.s32 1, %s6
  %s9 = scalar_select 0, %s8, %s6
  // Predicated region
  $region2: #{nlayer_discriminator_forward.7} parent=0 // pred_check
    _
  $region3: #{nlayer_discriminator_forward.7} parent=0 // pred_check_branch
    %11 = sbr.rel (0) target = $region5
  $region4: #{nlayer_discriminator_forward.7} parent=0 // pred_region
    _
  $region5: #{nlayer_discriminator_forward.7} parent=0 // pred_fallthru
    _
  // Predicated region
  $region6: #{nlayer_discriminator_forward.7} parent=0 // pred_check
    _
  $region7: #{nlayer_discriminator_forward.7} parent=0 // pred_check_branch
    %13 = sbr.rel (0) target = $region9
  $region8: #{nlayer_discriminator_forward.7} parent=0 // pred_region
    _
  $region9: #{nlayer_discriminator_forward.7} parent=0 // pred_fallthru
    _
  // Predicated region
  $region10: #{nlayer_discriminator_forward.7} parent=0 // pred_check
    _
  $region11: #{nlayer_discriminator_forward.7} parent=0 // pred_check_branch
    %15 = sbr.rel (0) target = $region13
  $region12: #{nlayer_discriminator_forward.7} parent=0 // pred_region
    _
  $region13: #{nlayer_discriminator_forward.7} parent=0 // pred_fallthru
    _
  // Predicated region
  $region14: #{nlayer_discriminator_forward.7} parent=0 // pred_check
    _
  $region15: #{nlayer_discriminator_forward.7} parent=0 // pred_check_branch
    %17 = sbr.rel (0) target = $region17
  $region16: #{nlayer_discriminator_forward.7} parent=0 // pred_region
    _
  $region17: #{nlayer_discriminator_forward.7} parent=0 // pred_fallthru
    _
  // Predicated region
  $region18: #{nlayer_discriminator_forward.7} parent=0 // pred_check
    _
  $region19: #{nlayer_discriminator_forward.7} parent=0 // pred_check_branch
    %19 = sbr.rel (0) target = $region21
  $region20: #{nlayer_discriminator_forward.7} parent=0 // pred_region
    _
  $region21: #{nlayer_discriminator_forward.7} parent=0 // pred_fallthru
    _
  %v20 = vld [vmem:[%s0] sm:$0xff]
  %v21 = vld [vmem:[%s0 + $0x8] sm:$0xff]
  %v22 = vld [vmem:[%s0 + $0x10] sm:$0x11]
  %v23 = vld [vmem:[%s1] sm:$0xf]
  %v24 = vld [vmem:[%s1 + $0x4] sm:$0xf]
  %v25 = vld [vmem:[%s1 + $0x8] sm:$0xf]
  %v26 = vld [vmem:[%s1 + $0xc] sm:$0xf]
  %v27 = vld [vmem:[%s1 + $0x10] sm:$0xf]
  %v28 = vld [vmem:[%s1 + $0x14] sm:$0xf]
  %v29 = vld [vmem:[%s1 + $0x18] sm:$0xf]
  %v30 = vld [vmem:[%s1 + $0x1c] sm:$0xf]
  %v31 = vld [vmem:[%s1 + $0x20] sm:$0xf]
  %v32 = vld [vmem:[%s1 + $0x24] sm:$0xf]
  %v33 = vld [vmem:[%s1 + $0x28] sm:$0xf]
  %v34 = vld [vmem:[%s1 + $0x2c] sm:$0xf]
  %v35 = vld [vmem:[%s1 + $0x30] sm:$0xf]
  %v36 = vld [vmem:[%s1 + $0x34] sm:$0xf]
  %v37 = vld [vmem:[%s1 + $0x38] sm:$0xf]
  %v38 = vld [vmem:[%s1 + $0x3c] sm:$0xf]
  %v39 = vld [vmem:[%s1 + $0x40] sm:$0xf]
  %v40 = vld [vmem:[%s1 + $0x44] sm:$0xf]
  %v41 = vld [vmem:[%s1 + $0x48] sm:$0xf]
  %v42 = vld [vmem:[%s1 + $0x4c] sm:$0xf]
  %v43 = vld [vmem:[%s1 + $0x50] sm:$0xf]
  %v44 = vld [vmem:[%s1 + $0x54] sm:$0xf]
  %v45 = vld [vmem:[%s1 + $0x58] sm:$0xf]
  %v46 = vld [vmem:[%s1 + $0x5c] sm:$0xf]
  %v47 = vld [vmem:[%s1 + $0x60] sm:$0xf]
  %v48 = vld [vmem:[%s1 + $0x64] sm:$0xf]
  %v49 = vld [vmem:[%s1 + $0x68] sm:$0xf]
  %v50 = vld [vmem:[%s1 + $0x6c] sm:$0xf]
  %v51 = vld [vmem:[%s1 + $0x70] sm:$0xf]
  %v52 = vld [vmem:[%s1 + $0x74] sm:$0xf]
  %v53 = vld [vmem:[%s1 + $0x78] sm:$0xf]
  %v54 = vld [vmem:[%s1 + $0x7c] sm:$0xf]
  %v55 = vld [vmem:[%s2] sm:$0x1]
  %v57 = vperm.slane %v55, 0
  %v62 = vunpack.c.l.b16 %v20
  %v63 = vunpack.c.h.b16 %v20
  %v64 = vunpack.c.l.b16 %v21
  %v65 = vunpack.c.h.b16 %v21
  %v66 = vunpack.c.l.b16 %v22
  %v67 = vunpack.c.h.b16 %v22
  %v68 = vpack.c.b16 %v64, %v62
  %v69 = vpack.c.b16 %v65, %v63
  %v70 = vpack.c.b16 %v66, %v66
  %v71 = vpack.c.b16 %v67, %v67
  %v108 = vunpack.c.l.b16 %v23
  %v109 = vunpack.c.l.b16 %v24
  %v110 = vunpack.c.l.b16 %v25
  %v111 = vunpack.c.l.b16 %v26
  %v112 = vunpack.c.l.b16 %v27
  %v113 = vunpack.c.l.b16 %v28
  %v114 = vunpack.c.l.b16 %v29
  %v115 = vunpack.c.l.b16 %v30
  %v116 = vunpack.c.l.b16 %v31
  %v117 = vunpack.c.l.b16 %v32
  %v118 = vunpack.c.l.b16 %v33
  %v119 = vunpack.c.l.b16 %v34
  %v120 = vunpack.c.l.b16 %v35
  %v121 = vunpack.c.l.b16 %v36
  %v122 = vunpack.c.l.b16 %v37
  %v123 = vunpack.c.l.b16 %v38
  %v124 = vunpack.c.l.b16 %v39
  %v125 = vunpack.c.l.b16 %v40
  %v126 = vunpack.c.l.b16 %v41
  %v127 = vunpack.c.l.b16 %v42
  %v128 = vunpack.c.l.b16 %v43
  %v129 = vunpack.c.l.b16 %v44
  %v130 = vunpack.c.l.b16 %v45
  %v131 = vunpack.c.l.b16 %v46
  %v132 = vunpack.c.l.b16 %v47
  %v133 = vunpack.c.l.b16 %v48
  %v134 = vunpack.c.l.b16 %v49
  %v135 = vunpack.c.l.b16 %v50
  %v136 = vunpack.c.l.b16 %v51
  %v137 = vunpack.c.l.b16 %v52
  %v138 = vunpack.c.l.b16 %v53
  %v139 = vunpack.c.l.b16 %v54
  %v140 = vpack.c.b16 %v109, %v108
  %v141 = vpack.c.b16 %v111, %v110
  %v142 = vpack.c.b16 %v113, %v112
  %v143 = vpack.c.b16 %v115, %v114
  %v144 = vpack.c.b16 %v117, %v116
  %v145 = vpack.c.b16 %v119, %v118
  %v146 = vpack.c.b16 %v121, %v120
  %v147 = vpack.c.b16 %v123, %v122
  %v148 = vpack.c.b16 %v125, %v124
  %v149 = vpack.c.b16 %v127, %v126
  %v150 = vpack.c.b16 %v129, %v128
  %v151 = vpack.c.b16 %v131, %v130
  %v152 = vpack.c.b16 %v133, %v132
  %v153 = vpack.c.b16 %v135, %v134
  %v154 = vpack.c.b16 %v137, %v136
  %v155 = vpack.c.b16 %v139, %v138
  %172 = vmatpush.bf16.msra.mxu0 %v147
  %173 = vmatpush.bf16.msra.mxu0 %v146
  %174 = vmatpush.bf16.msra.mxu0 %v145
  %175 = vmatpush.bf16.msra.mxu0 %v144
  %176 = vmatpush.bf16.msra.mxu0 %v143
  %177 = vmatpush.bf16.msra.mxu0 %v142
  %178 = vmatpush.bf16.msra.mxu0 %v141
  %179 = vmatpush.bf16.msra.mxu0 %v140
  %180 = vmatmul.bf16.gmra.mxu0 %v68
  %v181 = vpop.f32.mrf.mxu0
  %v182 = vadd.f32 %v57, %v181
  %v183 = vpop.f32.mrf.mxu0
  %v184 = vadd.f32 %v57, %v183
  %185 = vmatmul.bf16.gmra.mxu0 %v70
  %v186 = vpop.f32.mrf.mxu0
  %v187 = vadd.f32 %v57, %v186
  %v188 = vpop.f32.mrf.mxu0
  %189 = vdwg.mxu0
  %190 = vmatpush.bf16.msra.mxu0 %v155
  %191 = vmatpush.bf16.msra.mxu0 %v154
  %192 = vmatpush.bf16.msra.mxu0 %v153
  %193 = vmatpush.bf16.msra.mxu0 %v152
  %194 = vmatpush.bf16.msra.mxu0 %v151
  %195 = vmatpush.bf16.msra.mxu0 %v150
  %196 = vmatpush.bf16.msra.mxu0 %v149
  %197 = vmatpush.bf16.msra.mxu0 %v148
  %198 = vmatmul.bf16.gmra.mxu0 %v69
  %v199 = vpop.f32.mrf.mxu0
  %v200 = vadd.f32 %v182, %v199
  %v201 = vpop.f32.mrf.mxu0
  %v202 = vadd.f32 %v184, %v201
  %203 = vmatmul.bf16.gmra.mxu0 %v71
  %v204 = vpop.f32.mrf.mxu0
  %v205 = vadd.f32 %v187, %v204
  %v206 = vpop.f32.mrf.mxu0
  %207 = vdwg.mxu0
  %v208 = vadd.f32 %v200, %v202
  %vm209 = vcmask 1041408
  %v210 = vsel %vm209, %v205, 0.0
  %v211 = vadd.f32 %v208, %v210
  %v212 = vrot.slane %v211, 4
  %v213 = vadd.f32 %v211, %v212
  %v214 = vrot.slane %v213, 2
  %v215 = vadd.f32 %v213, %v214
  %v216 = vrot.slane %v215, 1
  %v217 = vadd.f32 %v215, %v216
  %v218 = vrcp.pop 18.0
  %v219 = vmul.f32 18.0, %v218
  %v220 = vsub.f32 1.0, %v219
  %v221 = vmul.f32 %v218, %v220
  %v222 = vadd.f32 %v218, %v221
  %vm223 = vweird.f32 %v218
  %v224 = vsel %vm223, %v218, %v222
  %v225 = vmul.f32 %v217, %v224
  %v226 = vsub.f32 %v200, %v225
  %v227 = vsub.f32 %v202, %v225
  %v228 = vsub.f32 %v205, %v225
  %v229 = vmul.f32 %v226, %v226
  %v230 = vmul.f32 %v227, %v227
  %v231 = vmul.f32 %v228, %v228
  %v232 = vadd.f32 %v229, %v230
  %v233 = vsel %vm209, %v231, 0.0
  %v234 = vadd.f32 %v232, %v233
  %v235 = vrot.slane %v234, 4
  %v236 = vadd.f32 %v234, %v235
  %v237 = vrot.slane %v236, 2
  %v238 = vadd.f32 %v236, %v237
  %v239 = vrot.slane %v238, 1
  %v240 = vadd.f32 %v238, %v239
  %v241 = vmul.f32 %v240, %v224
  %v242 = vadd.f32 %v241, 1e-05
  %v243 = vrsqrt.pop %v242
  %v244 = vmul.f32 %v243, %v242
  %v245 = vmul.f32 %v244, %v243
  %v246 = vmul.f32 0.5, %v245
  %v247 = vsub.f32 1.5, %v246
  %v248 = vmul.f32 %v243, %v247
  %vm249 = vweird.f32 %v242
  %vm250 = vweird.f32 %v243
  %vm251 = vmor %vm249, %vm250
  %v252 = vsel %vm251, %v243, %v248
  %v253 = vmul.f32 %v226, %v252
  %v254 = vmul.f32 %v227, %v252
  %v255 = vmul.f32 %v228, %v252
  %v256 = vld [vmem:[%s3] sm:$0x1]
  %v258 = vperm.slane %v256, 0
  %v260 = vmul.f32 %v253, %v258
  %v261 = vmul.f32 %v254, %v258
  %v262 = vmul.f32 %v255, %v258
  %v263 = vld [vmem:[%s4] sm:$0x1]
  %v265 = vperm.slane %v263, 0
  %v267 = vadd.f32 %v260, %v265
  %v268 = vadd.f32 %v261, %v265
  %v269 = vadd.f32 %v262, %v265
  %vm270 = vcmp.ge.f32.partialorder %v267, 0.0
  %vm271 = vcmp.ge.f32.partialorder %v268, 0.0
  %vm272 = vcmp.ge.f32.partialorder %v269, 0.0
  %v273 = vmul.f32 %v267, 0.2
  %v274 = vmul.f32 %v268, 0.2
  %v275 = vmul.f32 %v269, 0.2
  %v276 = vsel %vm270, %v267, %v273
  %v277 = vsel %vm271, %v268, %v274
  %v278 = vsel %vm272, %v269, %v275
  %v279 = vpack.c.bf16 %v276, %v276
  %v280 = vpack.c.bf16 %v277, %v277
  %v281 = vpack.c.bf16 %v278, %v278
  %282 = vst [vmem:[%s5] sm:$0xf] %v279
  %283 = vst [vmem:[%s5 + $0x4] sm:$0xf] %v280
  %284 = vst [vmem:[%s5 + $0x8] sm:$0x1] %v281
  // Predicated region
  $region22: #{nlayer_discriminator_forward.7} parent=0 // pred_check
    _
  $region23: #{nlayer_discriminator_forward.7} parent=0 // pred_check_branch
    %286 = sbr.rel (0) target = $region25
  $region24: #{nlayer_discriminator_forward.7} parent=0 // pred_region
    _
  $region25: #{nlayer_discriminator_forward.7} parent=0 // pred_fallthru
    _
  // Predicated region
  $region26: #{nlayer_discriminator_forward.7} parent=0 // pred_check
    _
  $region27: #{nlayer_discriminator_forward.7} parent=0 // pred_check_branch
    %288 = sbr.rel (0) target = $region29
  $region28: #{nlayer_discriminator_forward.7} parent=0 // pred_region
    _
  $region29: #{nlayer_discriminator_forward.7} parent=0 // pred_fallthru
    _

// kernel: nlayer_discriminator_forward.8
$region0: #{nlayer_discriminator_forward.8}
  #allocation0 [shape = 'u32[]', space=smem, size = 0x4, offset = 0x4, fixed_abs, tag = 'smem constant byte address 0x4 - core index']
  #allocation1 [shape = 'u32[72,128]{1,0:T(1,128)}', space=vmem, size = 0x9000, scoped, tag = 'internal scratch']
  %s0 = inlined_call_operand.vmem [shape: bf16[32,512], index: 0, kind: input, shape index: {}]
  %s1 = inlined_call_operand.vmem [shape: bf16[512,128], index: 1, kind: input, shape index: {}]
  %s2 = inlined_call_operand.vmem [shape: f32[1,128], index: 2, kind: input, shape index: {}]
  %s3 = inlined_call_operand.vmem [shape: f32[1,128], index: 3, kind: input, shape index: {}]
  %s4 = inlined_call_operand.vmem [shape: f32[1,128], index: 4, kind: input, shape index: {}]
  %s5 = inlined_call_operand.vmem [shape: bf16[32,128], index: 5, kind: output, shape index: {}]
  %s6 = sld [smem:[#allocation0]]
  $region30: #{nlayer_discriminator_forward.8} parent=0
    _
  %s8 = ssub.s32 1, %s6
  %s9 = scalar_select 0, %s8, %s6
  // Predicated region
  $region2: #{nlayer_discriminator_forward.8} parent=0 // pred_check
    _
  $region3: #{nlayer_discriminator_forward.8} parent=0 // pred_check_branch
    %11 = sbr.rel (0) target = $region5
  $region4: #{nlayer_discriminator_forward.8} parent=0 // pred_region
    _
  $region5: #{nlayer_discriminator_forward.8} parent=0 // pred_fallthru
    _
  // Predicated region
  $region6: #{nlayer_discriminator_forward.8} parent=0 // pred_check
    _
  $region7: #{nlayer_discriminator_forward.8} parent=0 // pred_check_branch
    %13 = sbr.rel (0) target = $region9
  $region8: #{nlayer_discriminator_forward.8} parent=0 // pred_region
    _
  $region9: #{nlayer_discriminator_forward.8} parent=0 // pred_fallthru
    _
  // Predicated region
  $region10: #{nlayer_discriminator_forward.8} parent=0 // pred_check
    _
  $region11: #{nlayer_discriminator_forward.8} parent=0 // pred_check_branch
    %15 = sbr.rel (0) target = $region13
  $region12: #{nlayer_discriminator_forward.8} parent=0 // pred_region
    _
  $region13: #{nlayer_discriminator_forward.8} parent=0 // pred_fallthru
    _
  // Predicated region
  $region14: #{nlayer_discriminator_forward.8} parent=0 // pred_check
    _
  $region15: #{nlayer_discriminator_forward.8} parent=0 // pred_check_branch
    %17 = sbr.rel (0) target = $region17
  $region16: #{nlayer_discriminator_forward.8} parent=0 // pred_region
    _
  $region17: #{nlayer_discriminator_forward.8} parent=0 // pred_fallthru
    _
  // Predicated region
  $region18: #{nlayer_discriminator_forward.8} parent=0 // pred_check
    _
  $region19: #{nlayer_discriminator_forward.8} parent=0 // pred_check_branch
    %19 = sbr.rel (0) target = $region21
  $region20: #{nlayer_discriminator_forward.8} parent=0 // pred_region
    _
  $region21: #{nlayer_discriminator_forward.8} parent=0 // pred_fallthru
    _
  %v20 = vld [vmem:[%s0] sm:$0xff]
  %v21 = vld [vmem:[%s0 + $0x8] sm:$0xff]
  %v22 = vld [vmem:[%s0 + $0x10] sm:$0xff]
  %v23 = vld [vmem:[%s0 + $0x18] sm:$0xff]
  %v24 = vld [vmem:[%s0 + $0x20] sm:$0xff]
  %v25 = vld [vmem:[%s0 + $0x28] sm:$0xff]
  %v26 = vld [vmem:[%s0 + $0x30] sm:$0xff]
  %v27 = vld [vmem:[%s0 + $0x38] sm:$0xff]
  %v28 = vld [vmem:[%s1] sm:$0xf]
  %v29 = vld [vmem:[%s1 + $0x4] sm:$0xf]
  %v30 = vld [vmem:[%s1 + $0x8] sm:$0xf]
  %v31 = vld [vmem:[%s1 + $0xc] sm:$0xf]
  %v32 = vld [vmem:[%s1 + $0x10] sm:$0xf]
  %v33 = vld [vmem:[%s1 + $0x14] sm:$0xf]
  %v34 = vld [vmem:[%s1 + $0x18] sm:$0xf]
  %v35 = vld [vmem:[%s1 + $0x1c] sm:$0xf]
  %v36 = vld [vmem:[%s1 + $0x20] sm:$0xf]
  %v37 = vld [vmem:[%s1 + $0x24] sm:$0xf]
  %v38 = vld [vmem:[%s1 + $0x28] sm:$0xf]
  %v39 = vld [vmem:[%s1 + $0x2c] sm:$0xf]
  %v40 = vld [vmem:[%s1 + $0x30] sm:$0xf]
  %v41 = vld [vmem:[%s1 + $0x34] sm:$0xf]
  %v42 = vld [vmem:[%s1 + $0x38] sm:$0xf]
  %v43 = vld [vmem:[%s1 + $0x3c] sm:$0xf]
  %v44 = vld [vmem:[%s1 + $0x40] sm:$0xf]
  %v45 = vld [vmem:[%s1 + $0x44] sm:$0xf]
  %v46 = vld [vmem:[%s1 + $0x48] sm:$0xf]
  %v47 = vld [vmem:[%s1 + $0x4c] sm:$0xf]
  %v48 = vld [vmem:[%s1 + $0x50] sm:$0xf]
  %v49 = vld [vmem:[%s1 + $0x54] sm:$0xf]
  %v50 = vld [vmem:[%s1 + $0x58] sm:$0xf]
  %v51 = vld [vmem:[%s1 + $0x5c] sm:$0xf]
  %v52 = vld [vmem:[%s1 + $0x60] sm:$0xf]
  %v53 = vld [vmem:[%s1 + $0x64] sm:$0xf]
  %v54 = vld [vmem:[%s1 + $0x68] sm:$0xf]
  %v55 = vld [vmem:[%s1 + $0x6c] sm:$0xf]
  %v56 = vld [vmem:[%s1 + $0x70] sm:$0xf]
  %v57 = vld [vmem:[%s1 + $0x74] sm:$0xf]
  %v58 = vld [vmem:[%s1 + $0x78] sm:$0xf]
  %v59 = vld [vmem:[%s1 + $0x7c] sm:$0xf]
  %v60 = vld [vmem:[%s1 + $0x80] sm:$0xf]
  %v61 = vld [vmem:[%s1 + $0x84] sm:$0xf]
  %v62 = vld [vmem:[%s1 + $0x88] sm:$0xf]
  %v63 = vld [vmem:[%s1 + $0x8c] sm:$0xf]
  %v64 = vld [vmem:[%s1 + $0x90] sm:$0xf]
  %v65 = vld [vmem:[%s1 + $0x94] sm:$0xf]
  %v66 = vld [vmem:[%s1 + $0x98] sm:$0xf]
  %v67 = vld [vmem:[%s1 + $0x9c] sm:$0xf]
  %v68 = vld [vmem:[%s1 + $0xa0] sm:$0xf]
  %v69 = vld [vmem:[%s1 + $0xa4] sm:$0xf]
  %v70 = vld [vmem:[%s1 + $0xa8] sm:$0xf]
  %v71 = vld [vmem:[%s1 + $0xac] sm:$0xf]
  %v72 = vld [vmem:[%s1 + $0xb0] sm:$0xf]
  %v73 = vld [vmem:[%s1 + $0xb4] sm:$0xf]
  %v74 = vld [vmem:[%s1 + $0xb8] sm:$0xf]
  %v75 = vld [vmem:[%s1 + $0xbc] sm:$0xf]
  %v76 = vld [vmem:[%s1 + $0xc0] sm:$0xf]
  %v77 = vld [vmem:[%s1 + $0xc4] sm:$0xf]
  %v78 = vld [vmem:[%s1 + $0xc8] sm:$0xf]
  %v79 = vld [vmem:[%s1 + $0xcc] sm:$0xf]
  %v80 = vld [vmem:[%s1 + $0xd0] sm:$0xf]
  %v81 = vld [vmem:[%s1 + $0xd4] sm:$0xf]
  %v82 = vld [vmem:[%s1 + $0xd8] sm:$0xf]
  %v83 = vld [vmem:[%s1 + $0xdc] sm:$0xf]
  %v84 = vld [vmem:[%s1 + $0xe0] sm:$0xf]
  %v85 = vld [vmem:[%s1 + $0xe4] sm:$0xf]
  %v86 = vld [vmem:[%s1 + $0xe8] sm:$0xf]
  %v87 = vld [vmem:[%s1 + $0xec] sm:$0xf]
  %v88 = vld [vmem:[%s1 + $0xf0] sm:$0xf]
  %v89 = vld [vmem:[%s1 + $0xf4] sm:$0xf]
  %v90 = vld [vmem:[%s1 + $0xf8] sm:$0xf]
  %v91 = vld [vmem:[%s1 + $0xfc] sm:$0xf]
  %v92 = vld [vmem:[%s2] sm:$0x1]
  %v94 = vperm.slane %v92, 0
  %v104 = vunpack.c.l.b16 %v20
  %v105 = vunpack.c.h.b16 %v20
  %v106 = vunpack.c.l.b16 %v21
  %v107 = vunpack.c.h.b16 %v21
  %v108 = vunpack.c.l.b16 %v22
  %v109 = vunpack.c.h.b16 %v22
  %v110 = vunpack.c.l.b16 %v23
  %v111 = vunpack.c.h.b16 %v23
  %v112 = vunpack.c.l.b16 %v24
  %v113 = vunpack.c.h.b16 %v24
  %v114 = vunpack.c.l.b16 %v25
  %v115 = vunpack.c.h.b16 %v25
  %v116 = vunpack.c.l.b16 %v26
  %v117 = vunpack.c.h.b16 %v26
  %v118 = vunpack.c.l.b16 %v27
  %v119 = vunpack.c.h.b16 %v27
  %v120 = vpack.c.b16 %v108, %v104
  %v121 = vpack.c.b16 %v109, %v105
  %v122 = vpack.c.b16 %v110, %v106
  %v123 = vpack.c.b16 %v111, %v107
  %v124 = vpack.c.b16 %v116, %v112
  %v125 = vpack.c.b16 %v117, %v113
  %v126 = vpack.c.b16 %v118, %v114
  %v127 = vpack.c.b16 %v119, %v115
  %v200 = vunpack.c.l.b16 %v28
  %v201 = vunpack.c.l.b16 %v29
  %v202 = vunpack.c.l.b16 %v30
  %v203 = vunpack.c.l.b16 %v31
  %v204 = vunpack.c.l.b16 %v32
  %v205 = vunpack.c.l.b16 %v33
  %v206 = vunpack.c.l.b16 %v34
  %v207 = vunpack.c.l.b16 %v35
  %v208 = vunpack.c.l.b16 %v36
  %v209 = vunpack.c.l.b16 %v37
  %v210 = vunpack.c.l.b16 %v38
  %v211 = vunpack.c.l.b16 %v39
  %v212 = vunpack.c.l.b16 %v40
  %v213 = vunpack.c.l.b16 %v41
  %v214 = vunpack.c.l.b16 %v42
  %v215 = vunpack.c.l.b16 %v43
  %v216 = vunpack.c.l.b16 %v44
  %v217 = vunpack.c.l.b16 %v45
  %v218 = vunpack.c.l.b16 %v46
  %v219 = vunpack.c.l.b16 %v47
  %v220 = vunpack.c.l.b16 %v48
  %v221 = vunpack.c.l.b16 %v49
  %v222 = vunpack.c.l.b16 %v50
  %v223 = vunpack.c.l.b16 %v51
  %v224 = vunpack.c.l.b16 %v52
  %v225 = vunpack.c.l.b16 %v53
  %v226 = vunpack.c.l.b16 %v54
  %v227 = vunpack.c.l.b16 %v55
  %v228 = vunpack.c.l.b16 %v56
  %v229 = vunpack.c.l.b16 %v57
  %v230 = vunpack.c.l.b16 %v58
  %v231 = vunpack.c.l.b16 %v59
  %v232 = vunpack.c.l.b16 %v60
  %v233 = vunpack.c.l.b16 %v61
  %v234 = vunpack.c.l.b16 %v62
  %v235 = vunpack.c.l.b16 %v63
  %v236 = vunpack.c.l.b16 %v64
  %v237 = vunpack.c.l.b16 %v65
  %v238 = vunpack.c.l.b16 %v66
  %v239 = vunpack.c.l.b16 %v67
  %v240 = vunpack.c.l.b16 %v68
  %v241 = vunpack.c.l.b16 %v69
  %v242 = vunpack.c.l.b16 %v70
  %v243 = vunpack.c.l.b16 %v71
  %v244 = vunpack.c.l.b16 %v72
  %v245 = vunpack.c.l.b16 %v73
  %v246 = vunpack.c.l.b16 %v74
  %v247 = vunpack.c.l.b16 %v75
  %v248 = vunpack.c.l.b16 %v76
  %v249 = vunpack.c.l.b16 %v77
  %v250 = vunpack.c.l.b16 %v78
  %v251 = vunpack.c.l.b16 %v79
  %v252 = vunpack.c.l.b16 %v80
  %v253 = vunpack.c.l.b16 %v81
  %v254 = vunpack.c.l.b16 %v82
  %v255 = vunpack.c.l.b16 %v83
  %v256 = vunpack.c.l.b16 %v84
  %v257 = vunpack.c.l.b16 %v85
  %v258 = vunpack.c.l.b16 %v86
  %v259 = vunpack.c.l.b16 %v87
  %v260 = vunpack.c.l.b16 %v88
  %v261 = vunpack.c.l.b16 %v89
  %v262 = vunpack.c.l.b16 %v90
  %v263 = vunpack.c.l.b16 %v91
  %v264 = vpack.c.b16 %v201, %v200
  %v265 = vpack.c.b16 %v203, %v202
  %v266 = vpack.c.b16 %v205, %v204
  %v267 = vpack.c.b16 %v207, %v206
  %v268 = vpack.c.b16 %v209, %v208
  %v269 = vpack.c.b16 %v211, %v210
  %v270 = vpack.c.b16 %v213, %v212
  %v271 = vpack.c.b16 %v215, %v214
  %v272 = vpack.c.b16 %v217, %v216
  %v273 = vpack.c.b16 %v219, %v218
  %v274 = vpack.c.b16 %v221, %v220
  %v275 = vpack.c.b16 %v223, %v222
  %v276 = vpack.c.b16 %v225, %v224
  %v277 = vpack.c.b16 %v227, %v226
  %v278 = vpack.c.b16 %v229, %v228
  %v279 = vpack.c.b16 %v231, %v230
  %v280 = vpack.c.b16 %v233, %v232
  %v281 = vpack.c.b16 %v235, %v234
  %v282 = vpack.c.b16 %v237, %v236
  %v283 = vpack.c.b16 %v239, %v238
  %v284 = vpack.c.b16 %v241, %v240
  %v285 = vpack.c.b16 %v243, %v242
  %v286 = vpack.c.b16 %v245, %v244
  %v287 = vpack.c.b16 %v247, %v246
  %v288 = vpack.c.b16 %v249, %v248
  %v289 = vpack.c.b16 %v251, %v250
  %v290 = vpack.c.b16 %v253, %v252
  %v291 = vpack.c.b16 %v255, %v254
  %v292 = vpack.c.b16 %v257, %v256
  %v293 = vpack.c.b16 %v259, %v258
  %v294 = vpack.c.b16 %v261, %v260
  %v295 = vpack.c.b16 %v263, %v262
  %328 = vmatpush.bf16.msra.mxu0 %v271
  %329 = vmatpush.bf16.msra.mxu0 %v270
  %330 = vmatpush.bf16.msra.mxu0 %v269
  %331 = vmatpush.bf16.msra.mxu0 %v268
  %332 = vmatpush.bf16.msra.mxu0 %v267
  %333 = vmatpush.bf16.msra.mxu0 %v266
  %334 = vmatpush.bf16.msra.mxu0 %v265
  %335 = vmatpush.bf16.msra.mxu0 %v264
  %336 = vmatmul.bf16.gmra.mxu0 %v120
  %v337 = vpop.f32.mrf.mxu0
  %v338 = vadd.f32 %v94, %v337
  %v339 = vpop.f32.mrf.mxu0
  %v340 = vadd.f32 %v94, %v339
  %341 = vmatmul.bf16.gmra.mxu0 %v124
  %v342 = vpop.f32.mrf.mxu0
  %v343 = vadd.f32 %v94, %v342
  %v344 = vpop.f32.mrf.mxu0
  %v345 = vadd.f32 %v94, %v344
  %346 = vdwg.mxu0
  %347 = vmatpush.bf16.msra.mxu0 %v279
  %348 = vmatpush.bf16.msra.mxu0 %v278
  %349 = vmatpush.bf16.msra.mxu0 %v277
  %350 = vmatpush.bf16.msra.mxu0 %v276
  %351 = vmatpush.bf16.msra.mxu0 %v275
  %352 = vmatpush.bf16.msra.mxu0 %v274
  %353 = vmatpush.bf16.msra.mxu0 %v273
  %354 = vmatpush.bf16.msra.mxu0 %v272
  %355 = vmatmul.bf16.gmra.mxu0 %v121
  %v356 = vpop.f32.mrf.mxu0
  %v357 = vadd.f32 %v338, %v356
  %v358 = vpop.f32.mrf.mxu0
  %v359 = vadd.f32 %v340, %v358
  %360 = vmatmul.bf16.gmra.mxu0 %v125
  %v361 = vpop.f32.mrf.mxu0
  %v362 = vadd.f32 %v343, %v361
  %v363 = vpop.f32.mrf.mxu0
  %v364 = vadd.f32 %v345, %v363
  %365 = vdwg.mxu0
  %366 = vmatpush.bf16.msra.mxu0 %v287
  %367 = vmatpush.bf16.msra.mxu0 %v286
  %368 = vmatpush.bf16.msra.mxu0 %v285
  %369 = vmatpush.bf16.msra.mxu0 %v284
  %370 = vmatpush.bf16.msra.mxu0 %v283
  %371 = vmatpush.bf16.msra.mxu0 %v282
  %372 = vmatpush.bf16.msra.mxu0 %v281
  %373 = vmatpush.bf16.msra.mxu0 %v280
  %374 = vmatmul.bf16.gmra.mxu0 %v122
  %v375 = vpop.f32.mrf.mxu0
  %v376 = vadd.f32 %v357, %v375
  %v377 = vpop.f32.mrf.mxu0
  %v378 = vadd.f32 %v359, %v377
  %379 = vmatmul.bf16.gmra.mxu0 %v126
  %v380 = vpop.f32.mrf.mxu0
  %v381 = vadd.f32 %v362, %v380
  %v382 = vpop.f32.mrf.mxu0
  %v383 = vadd.f32 %v364, %v382
  %384 = vdwg.mxu0
  %385 = vmatpush.bf16.msra.mxu0 %v295
  %386 = vmatpush.bf16.msra.mxu0 %v294
  %387 = vmatpush.bf16.msra.mxu0 %v293
  %388 = vmatpush.bf16.msra.mxu0 %v292
  %389 = vmatpush.bf16.msra.mxu0 %v291
  %390 = vmatpush.bf16.msra.mxu0 %v290
  %391 = vmatpush.bf16.msra.mxu0 %v289
  %392 = vmatpush.bf16.msra.mxu0 %v288
  %393 = vmatmul.bf16.gmra.mxu0 %v123
  %v394 = vpop.f32.mrf.mxu0
  %v395 = vadd.f32 %v376, %v394
  %v396 = vpop.f32.mrf.mxu0
  %v397 = vadd.f32 %v378, %v396
  %398 = vmatmul.bf16.gmra.mxu0 %v127
  %v399 = vpop.f32.mrf.mxu0
  %v400 = vadd.f32 %v381, %v399
  %v401 = vpop.f32.mrf.mxu0
  %v402 = vadd.f32 %v383, %v401
  %403 = vdwg.mxu0
  %v404 = vadd.f32 %v395, %v397
  %v405 = vadd.f32 %v404, %v400
  %v406 = vadd.f32 %v405, %v402
  %v407 = vrot.slane %v406, 4
  %v408 = vadd.f32 %v406, %v407
  %v409 = vrot.slane %v408, 2
  %v410 = vadd.f32 %v408, %v409
  %v411 = vrot.slane %v410, 1
  %v412 = vadd.f32 %v410, %v411
  %v413 = vrcp.pop 32.0
  %v414 = vmul.f32 32.0, %v413
  %v415 = vsub.f32 1.0, %v414
  %v416 = vmul.f32 %v413, %v415
  %v417 = vadd.f32 %v413, %v416
  %vm418 = vweird.f32 %v413
  %v419 = vsel %vm418, %v413, %v417
  %v420 = vmul.f32 %v412, %v419
  %v421 = vsub.f32 %v395, %v420
  %v422 = vsub.f32 %v397, %v420
  %v423 = vsub.f32 %v400, %v420
  %v424 = vsub.f32 %v402, %v420
  %v425 = vmul.f32 %v421, %v421
  %v426 = vmul.f32 %v422, %v422
  %v427 = vmul.f32 %v423, %v423
  %v428 = vmul.f32 %v424, %v424
  %v429 = vadd.f32 %v425, %v426
  %v430 = vadd.f32 %v429, %v427
  %v431 = vadd.f32 %v430, %v428
  %v432 = vrot.slane %v431, 4
  %v433 = vadd.f32 %v431, %v432
  %v434 = vrot.slane %v433, 2
  %v435 = vadd.f32 %v433, %v434
  %v436 = vrot.slane %v435, 1
  %v437 = vadd.f32 %v435, %v436
  %v438 = vmul.f32 %v437, %v419
  %v439 = vadd.f32 %v438, 1e-05
  %v440 = vrsqrt.pop %v439
  %v441 = vmul.f32 %v440, %v439
  %v442 = vmul.f32 %v441, %v440
  %v443 = vmul.f32 0.5, %v442
  %v444 = vsub.f32 1.5, %v443
  %v445 = vmul.f32 %v440, %v444
  %vm446 = vweird.f32 %v439
  %vm447 = vweird.f32 %v440
  %vm448 = vmor %vm446, %vm447
  %v449 = vsel %vm448, %v440, %v445
  %v450 = vmul.f32 %v421, %v449
  %v451 = vmul.f32 %v422, %v449
  %v452 = vmul.f32 %v423, %v449
  %v453 = vmul.f32 %v424, %v449
  %v454 = vld [vmem:[%s3] sm:$0x1]
  %v456 = vperm.slane %v454, 0
  %v458 = vmul.f32 %v450, %v456
  %v459 = vmul.f32 %v451, %v456
  %v460 = vmul.f32 %v452, %v456
  %v461 = vmul.f32 %v453, %v456
  %v462 = vld [vmem:[%s4] sm:$0x1]
  %v464 = vperm.slane %v462, 0
  %v466 = vadd.f32 %v458, %v464
  %v467 = vadd.f32 %v459, %v464
  %v468 = vadd.f32 %v460, %v464
  %v469 = vadd.f32 %v461, %v464
  %vm470 = vcmp.ge.f32.partialorder %v466, 0.0
  %vm471 = vcmp.ge.f32.partialorder %v467, 0.0
  %vm472 = vcmp.ge.f32.partialorder %v468, 0.0
  %vm473 = vcmp.ge.f32.partialorder %v469, 0.0
  %v474 = vmul.f32 %v466, 0.2
  %v475 = vmul.f32 %v467, 0.2
  %v476 = vmul.f32 %v468, 0.2
  %v477 = vmul.f32 %v469, 0.2
  %v478 = vsel %vm470, %v466, %v474
  %v479 = vsel %vm471, %v467, %v475
  %v480 = vsel %vm472, %v468, %v476
  %v481 = vsel %vm473, %v469, %v477
  %v482 = vpack.c.bf16 %v478, %v478
  %v483 = vpack.c.bf16 %v479, %v479
  %v484 = vpack.c.bf16 %v480, %v480
  %v485 = vpack.c.bf16 %v481, %v481
  %486 = vst [vmem:[%s5] sm:$0xf] %v482
  %487 = vst [vmem:[%s5 + $0x4] sm:$0xf] %v483
  %488 = vst [vmem:[%s5 + $0x8] sm:$0xf] %v484
  %489 = vst [vmem:[%s5 + $0xc] sm:$0xf] %v485
  // Predicated region
  $region22: #{nlayer_discriminator_forward.8} parent=0 // pred_check
    _
  $region23: #{nlayer_discriminator_forward.8} parent=0 // pred_check_branch
    %491 = sbr.rel (0) target = $region25
  $region24: #{nlayer_discriminator_forward.8} parent=0 // pred_region
    _
  $region25: #{nlayer_discriminator_forward.8} parent=0 // pred_fallthru
    _
  // Predicated region
  $region26: #{nlayer_discriminator_forward.8} parent=0 // pred_check
    _
  $region27: #{nlayer_discriminator_forward.8} parent=0 // pred_check_branch
    %493 = sbr.rel (0) target = $region29
  $region28: #{nlayer_discriminator_forward.8} parent=0 // pred_region
    _
  $region29: #{nlayer_discriminator_forward.8} parent=0 // pred_fallthru
    _

// kernel: nlayer_discriminator_forward.9
$region0: #{nlayer_discriminator_forward.9}
  #allocation0 [shape = 'u32[]', space=smem, size = 0x4, offset = 0x4, fixed_abs, tag = 'smem constant byte address 0x4 - core index']
  #allocation1 [shape = 'u32[72,128]{1,0:T(1,128)}', space=vmem, size = 0x9000, scoped, tag = 'internal scratch']
  %s0 = inlined_call_operand.vmem [shape: bf16[50,1024], index: 0, kind: input, shape index: {}]
  %s1 = inlined_call_operand.vmem [shape: bf16[1024,128], index: 1, kind: input, shape index: {}]
  %s2 = inlined_call_operand.vmem [shape: f32[1,128], index: 2, kind: input, shape index: {}]
  %s3 = inlined_call_operand.vmem [shape: f32[50,128], index: 3, kind: output, shape index: {}]
  %s4 = sld [smem:[#allocation0]]
  $region22: #{nlayer_discriminator_forward.9} parent=0
    _
  %s6 = ssub.s32 1, %s4
  %s7 = scalar_select 0, %s6, %s4
  // Predicated region
  $region2: #{nlayer_discriminator_forward.9} parent=0 // pred_check
    _
  $region3: #{nlayer_discriminator_forward.9} parent=0 // pred_check_branch
    %9 = sbr.rel (0) target = $region5
  $region4: #{nlayer_discriminator_forward.9} parent=0 // pred_region
    _
  $region5: #{nlayer_discriminator_forward.9} parent=0 // pred_fallthru
    _
  // Predicated region
  $region6: #{nlayer_discriminator_forward.9} parent=0 // pred_check
    _
  $region7: #{nlayer_discriminator_forward.9} parent=0 // pred_check_branch
    %11 = sbr.rel (0) target = $region9
  $region8: #{nlayer_discriminator_forward.9} parent=0 // pred_region
    _
  $region9: #{nlayer_discriminator_forward.9} parent=0 // pred_fallthru
    _
  // Predicated region
  $region10: #{nlayer_discriminator_forward.9} parent=0 // pred_check
    _
  $region11: #{nlayer_discriminator_forward.9} parent=0 // pred_check_branch
    %13 = sbr.rel (0) target = $region13
  $region12: #{nlayer_discriminator_forward.9} parent=0 // pred_region
    _
  $region13: #{nlayer_discriminator_forward.9} parent=0 // pred_fallthru
    _
  %v14 = vld [vmem:[%s0] sm:$0xff]
  %v15 = vld [vmem:[%s0 + $0x8] sm:$0xff]
  %v16 = vld [vmem:[%s0 + $0x10] sm:$0xff]
  %v17 = vld [vmem:[%s0 + $0x18] sm:$0xff]
  %v18 = vld [vmem:[%s0 + $0x20] sm:$0xff]
  %v19 = vld [vmem:[%s0 + $0x28] sm:$0xff]
  %v20 = vld [vmem:[%s0 + $0x30] sm:$0xff]
  %v21 = vld [vmem:[%s0 + $0x38] sm:$0xff]
  %v22 = vld [vmem:[%s0 + $0x40] sm:$0xff]
  %v23 = vld [vmem:[%s0 + $0x48] sm:$0xff]
  %v24 = vld [vmem:[%s0 + $0x50] sm:$0xff]
  %v25 = vld [vmem:[%s0 + $0x58] sm:$0xff]
  %v26 = vld [vmem:[%s0 + $0x60] sm:$0xff]
  %v27 = vld [vmem:[%s0 + $0x68] sm:$0xff]
  %v28 = vld [vmem:[%s0 + $0x70] sm:$0xff]
  %v29 = vld [vmem:[%s0 + $0x78] sm:$0xff]
  %v30 = vld [vmem:[%s0 + $0x80] sm:$0xff]
  %v31 = vld [vmem:[%s0 + $0x88] sm:$0xff]
  %v32 = vld [vmem:[%s0 + $0x90] sm:$0xff]
  %v33 = vld [vmem:[%s0 + $0x98] sm:$0xff]
  %v34 = vld [vmem:[%s0 + $0xa0] sm:$0xff]
  %v35 = vld [vmem:[%s0 + $0xa8] sm:$0xff]
  %v36 = vld [vmem:[%s0 + $0xb0] sm:$0xff]
  %v37 = vld [vmem:[%s0 + $0xb8] sm:$0xff]
  %v38 = vld [vmem:[%s0 + $0xc0] sm:$0x11]
  %v39 = vld [vmem:[%s0 + $0xc8] sm:$0x11]
  %v40 = vld [vmem:[%s0 + $0xd0] sm:$0x11]
  %v41 = vld [vmem:[%s0 + $0xd8] sm:$0x11]
  %v42 = vld [vmem:[%s1] sm:$0xf]
  %v43 = vld [vmem:[%s1 + $0x4] sm:$0xf]
  %v44 = vld [vmem:[%s1 + $0x8] sm:$0xf]
  %v45 = vld [vmem:[%s1 + $0xc] sm:$0xf]
  %v46 = vld [vmem:[%s1 + $0x10] sm:$0xf]
  %v47 = vld [vmem:[%s1 + $0x14] sm:$0xf]
  %v48 = vld [vmem:[%s1 + $0x18] sm:$0xf]
  %v49 = vld [vmem:[%s1 + $0x1c] sm:$0xf]
  %v50 = vld [vmem:[%s1 + $0x20] sm:$0xf]
  %v51 = vld [vmem:[%s1 + $0x24] sm:$0xf]
  %v52 = vld [vmem:[%s1 + $0x28] sm:$0xf]
  %v53 = vld [vmem:[%s1 + $0x2c] sm:$0xf]
  %v54 = vld [vmem:[%s1 + $0x30] sm:$0xf]
  %v55 = vld [vmem:[%s1 + $0x34] sm:$0xf]
  %v56 = vld [vmem:[%s1 + $0x38] sm:$0xf]
  %v57 = vld [vmem:[%s1 + $0x3c] sm:$0xf]
  %v58 = vld [vmem:[%s1 + $0x40] sm:$0xf]
  %v59 = vld [vmem:[%s1 + $0x44] sm:$0xf]
  %v60 = vld [vmem:[%s1 + $0x48] sm:$0xf]
  %v61 = vld [vmem:[%s1 + $0x4c] sm:$0xf]
  %v62 = vld [vmem:[%s1 + $0x50] sm:$0xf]
  %v63 = vld [vmem:[%s1 + $0x54] sm:$0xf]
  %v64 = vld [vmem:[%s1 + $0x58] sm:$0xf]
  %v65 = vld [vmem:[%s1 + $0x5c] sm:$0xf]
  %v66 = vld [vmem:[%s1 + $0x60] sm:$0xf]
  %v67 = vld [vmem:[%s1 + $0x64] sm:$0xf]
  %v68 = vld [vmem:[%s1 + $0x68] sm:$0xf]
  %v69 = vld [vmem:[%s1 + $0x6c] sm:$0xf]
  %v70 = vld [vmem:[%s1 + $0x70] sm:$0xf]
  %v71 = vld [vmem:[%s1 + $0x74] sm:$0xf]
  %v72 = vld [vmem:[%s1 + $0x78] sm:$0xf]
  %v73 = vld [vmem:[%s1 + $0x7c] sm:$0xf]
  %v74 = vld [vmem:[%s1 + $0x80] sm:$0xf]
  %v75 = vld [vmem:[%s1 + $0x84] sm:$0xf]
  %v76 = vld [vmem:[%s1 + $0x88] sm:$0xf]
  %v77 = vld [vmem:[%s1 + $0x8c] sm:$0xf]
  %v78 = vld [vmem:[%s1 + $0x90] sm:$0xf]
  %v79 = vld [vmem:[%s1 + $0x94] sm:$0xf]
  %v80 = vld [vmem:[%s1 + $0x98] sm:$0xf]
  %v81 = vld [vmem:[%s1 + $0x9c] sm:$0xf]
  %v82 = vld [vmem:[%s1 + $0xa0] sm:$0xf]
  %v83 = vld [vmem:[%s1 + $0xa4] sm:$0xf]
  %v84 = vld [vmem:[%s1 + $0xa8] sm:$0xf]
  %v85 = vld [vmem:[%s1 + $0xac] sm:$0xf]
  %v86 = vld [vmem:[%s1 + $0xb0] sm:$0xf]
  %v87 = vld [vmem:[%s1 + $0xb4] sm:$0xf]
  %v88 = vld [vmem:[%s1 + $0xb8] sm:$0xf]
  %v89 = vld [vmem:[%s1 + $0xbc] sm:$0xf]
  %v90 = vld [vmem:[%s1 + $0xc0] sm:$0xf]
  %v91 = vld [vmem:[%s1 + $0xc4] sm:$0xf]
  %v92 = vld [vmem:[%s1 + $0xc8] sm:$0xf]
  %v93 = vld [vmem:[%s1 + $0xcc] sm:$0xf]
  %v94 = vld [vmem:[%s1 + $0xd0] sm:$0xf]
  %v95 = vld [vmem:[%s1 + $0xd4] sm:$0xf]
  %v96 = vld [vmem:[%s1 + $0xd8] sm:$0xf]
  %v97 = vld [vmem:[%s1 + $0xdc] sm:$0xf]
  %v98 = vld [vmem:[%s1 + $0xe0] sm:$0xf]
  %v99 = vld [vmem:[%s1 + $0xe4] sm:$0xf]
  %v100 = vld [vmem:[%s1 + $0xe8] sm:$0xf]
  %v101 = vld [vmem:[%s1 + $0xec] sm:$0xf]
  %v102 = vld [vmem:[%s1 + $0xf0] sm:$0xf]
  %v103 = vld [vmem:[%s1 + $0xf4] sm:$0xf]
  %v104 = vld [vmem:[%s1 + $0xf8] sm:$0xf]
  %v105 = vld [vmem:[%s1 + $0xfc] sm:$0xf]
  %v106 = vld [vmem:[%s1 + $0x100] sm:$0xf]
  %v107 = vld [vmem:[%s1 + $0x104] sm:$0xf]
  %v108 = vld [vmem:[%s1 + $0x108] sm:$0xf]
  %v109 = vld [vmem:[%s1 + $0x10c] sm:$0xf]
  %v110 = vld [vmem:[%s1 + $0x110] sm:$0xf]
  %v111 = vld [vmem:[%s1 + $0x114] sm:$0xf]
  %v112 = vld [vmem:[%s1 + $0x118] sm:$0xf]
  %v113 = vld [vmem:[%s1 + $0x11c] sm:$0xf]
  %v114 = vld [vmem:[%s1 + $0x120] sm:$0xf]
  %v115 = vld [vmem:[%s1 + $0x124] sm:$0xf]
  %v116 = vld [vmem:[%s1 + $0x128] sm:$0xf]
  %v117 = vld [vmem:[%s1 + $0x12c] sm:$0xf]
  %v118 = vld [vmem:[%s1 + $0x130] sm:$0xf]
  %v119 = vld [vmem:[%s1 + $0x134] sm:$0xf]
  %v120 = vld [vmem:[%s1 + $0x138] sm:$0xf]
  %v121 = vld [vmem:[%s1 + $0x13c] sm:$0xf]
  %v122 = vld [vmem:[%s1 + $0x140] sm:$0xf]
  %v123 = vld [vmem:[%s1 + $0x144] sm:$0xf]
  %v124 = vld [vmem:[%s1 + $0x148] sm:$0xf]
  %v125 = vld [vmem:[%s1 + $0x14c] sm:$0xf]
  %v126 = vld [vmem:[%s1 + $0x150] sm:$0xf]
  %v127 = vld [vmem:[%s1 + $0x154] sm:$0xf]
  %v128 = vld [vmem:[%s1 + $0x158] sm:$0xf]
  %v129 = vld [vmem:[%s1 + $0x15c] sm:$0xf]
  %v130 = vld [vmem:[%s1 + $0x160] sm:$0xf]
  %v131 = vld [vmem:[%s1 + $0x164] sm:$0xf]
  %v132 = vld [vmem:[%s1 + $0x168] sm:$0xf]
  %v133 = vld [vmem:[%s1 + $0x16c] sm:$0xf]
  %v134 = vld [vmem:[%s1 + $0x170] sm:$0xf]
  %v135 = vld [vmem:[%s1 + $0x174] sm:$0xf]
  %v136 = vld [vmem:[%s1 + $0x178] sm:$0xf]
  %v137 = vld [vmem:[%s1 + $0x17c] sm:$0xf]
  %v138 = vld [vmem:[%s1 + $0x180] sm:$0xf]
  %v139 = vld [vmem:[%s1 + $0x184] sm:$0xf]
  %v140 = vld [vmem:[%s1 + $0x188] sm:$0xf]
  %v141 = vld [vmem:[%s1 + $0x18c] sm:$0xf]
  %v142 = vld [vmem:[%s1 + $0x190] sm:$0xf]
  %v143 = vld [vmem:[%s1 + $0x194] sm:$0xf]
  %v144 = vld [vmem:[%s1 + $0x198] sm:$0xf]
  %v145 = vld [vmem:[%s1 + $0x19c] sm:$0xf]
  %v146 = vld [vmem:[%s1 + $0x1a0] sm:$0xf]
  %v147 = vld [vmem:[%s1 + $0x1a4] sm:$0xf]
  %v148 = vld [vmem:[%s1 + $0x1a8] sm:$0xf]
  %v149 = vld [vmem:[%s1 + $0x1ac] sm:$0xf]
  %v150 = vld [vmem:[%s1 + $0x1b0] sm:$0xf]
  %v151 = vld [vmem:[%s1 + $0x1b4] sm:$0xf]
  %v152 = vld [vmem:[%s1 + $0x1b8] sm:$0xf]
  %v153 = vld [vmem:[%s1 + $0x1bc] sm:$0xf]
  %v154 = vld [vmem:[%s1 + $0x1c0] sm:$0xf]
  %v155 = vld [vmem:[%s1 + $0x1c4] sm:$0xf]
  %v156 = vld [vmem:[%s1 + $0x1c8] sm:$0xf]
  %v157 = vld [vmem:[%s1 + $0x1cc] sm:$0xf]
  %v158 = vld [vmem:[%s1 + $0x1d0] sm:$0xf]
  %v159 = vld [vmem:[%s1 + $0x1d4] sm:$0xf]
  %v160 = vld [vmem:[%s1 + $0x1d8] sm:$0xf]
  %v161 = vld [vmem:[%s1 + $0x1dc] sm:$0xf]
  %v162 = vld [vmem:[%s1 + $0x1e0] sm:$0xf]
  %v163 = vld [vmem:[%s1 + $0x1e4] sm:$0xf]
  %v164 = vld [vmem:[%s1 + $0x1e8] sm:$0xf]
  %v165 = vld [vmem:[%s1 + $0x1ec] sm:$0xf]
  %v166 = vld [vmem:[%s1 + $0x1f0] sm:$0xf]
  %v167 = vld [vmem:[%s1 + $0x1f4] sm:$0xf]
  %v168 = vld [vmem:[%s1 + $0x1f8] sm:$0xf]
  %v169 = vld [vmem:[%s1 + $0x1fc] sm:$0xf]
  %v170 = vld [vmem:[%s2] sm:$0x1]
  %v172 = vperm.slane %v170, 0
  %v202 = vunpack.c.l.b16 %v14
  %v203 = vunpack.c.h.b16 %v14
  %v204 = vunpack.c.l.b16 %v15
  %v205 = vunpack.c.h.b16 %v15
  %v206 = vunpack.c.l.b16 %v16
  %v207 = vunpack.c.h.b16 %v16
  %v208 = vunpack.c.l.b16 %v17
  %v209 = vunpack.c.h.b16 %v17
  %v210 = vunpack.c.l.b16 %v18
  %v211 = vunpack.c.h.b16 %v18
  %v212 = vunpack.c.l.b16 %v19
  %v213 = vunpack.c.h.b16 %v19
  %v214 = vunpack.c.l.b16 %v20
  %v215 = vunpack.c.h.b16 %v20
  %v216 = vunpack.c.l.b16 %v21
  %v217 = vunpack.c.h.b16 %v21
  %v218 = vunpack.c.l.b16 %v22
  %v219 = vunpack.c.h.b16 %v22
  %v220 = vunpack.c.l.b16 %v23
  %v221 = vunpack.c.h.b16 %v23
  %v222 = vunpack.c.l.b16 %v24
  %v223 = vunpack.c.h.b16 %v24
  %v224 = vunpack.c.l.b16 %v25
  %v225 = vunpack.c.h.b16 %v25
  %v226 = vunpack.c.l.b16 %v26
  %v227 = vunpack.c.h.b16 %v26
  %v228 = vunpack.c.l.b16 %v27
  %v229 = vunpack.c.h.b16 %v27
  %v230 = vunpack.c.l.b16 %v28
  %v231 = vunpack.c.h.b16 %v28
  %v232 = vunpack.c.l.b16 %v29
  %v233 = vunpack.c.h.b16 %v29
  %v234 = vunpack.c.l.b16 %v30
  %v235 = vunpack.c.h.b16 %v30
  %v236 = vunpack.c.l.b16 %v31
  %v237 = vunpack.c.h.b16 %v31
  %v238 = vunpack.c.l.b16 %v32
  %v239 = vunpack.c.h.b16 %v32
  %v240 = vunpack.c.l.b16 %v33
  %v241 = vunpack.c.h.b16 %v33
  %v242 = vunpack.c.l.b16 %v34
  %v243 = vunpack.c.h.b16 %v34
  %v244 = vunpack.c.l.b16 %v35
  %v245 = vunpack.c.h.b16 %v35
  %v246 = vunpack.c.l.b16 %v36
  %v247 = vunpack.c.h.b16 %v36
  %v248 = vunpack.c.l.b16 %v37
  %v249 = vunpack.c.h.b16 %v37
  %v250 = vunpack.c.l.b16 %v38
  %v251 = vunpack.c.h.b16 %v38
  %v252 = vunpack.c.l.b16 %v39
  %v253 = vunpack.c.h.b16 %v39
  %v254 = vunpack.c.l.b16 %v40
  %v255 = vunpack.c.h.b16 %v40
  %v256 = vunpack.c.l.b16 %v41
  %v257 = vunpack.c.h.b16 %v41
  %v258 = vpack.c.b16 %v210, %v202
  %v259 = vpack.c.b16 %v211, %v203
  %v260 = vpack.c.b16 %v212, %v204
  %v261 = vpack.c.b16 %v213, %v205
  %v262 = vpack.c.b16 %v214, %v206
  %v263 = vpack.c.b16 %v215, %v207
  %v264 = vpack.c.b16 %v216, %v208
  %v265 = vpack.c.b16 %v217, %v209
  %v266 = vpack.c.b16 %v226, %v218
  %v267 = vpack.c.b16 %v227, %v219
  %v268 = vpack.c.b16 %v228, %v220
  %v269 = vpack.c.b16 %v229, %v221
  %v270 = vpack.c.b16 %v230, %v222
  %v271 = vpack.c.b16 %v231, %v223
  %v272 = vpack.c.b16 %v232, %v224
  %v273 = vpack.c.b16 %v233, %v225
  %v274 = vpack.c.b16 %v242, %v234
  %v275 = vpack.c.b16 %v243, %v235
  %v276 = vpack.c.b16 %v244, %v236
  %v277 = vpack.c.b16 %v245, %v237
  %v278 = vpack.c.b16 %v246, %v238
  %v279 = vpack.c.b16 %v247, %v239
  %v280 = vpack.c.b16 %v248, %v240
  %v281 = vpack.c.b16 %v249, %v241
  %v282 = vpack.c.b16 %v250, %v250
  %v283 = vpack.c.b16 %v251, %v251
  %v284 = vpack.c.b16 %v252, %v252
  %v285 = vpack.c.b16 %v253, %v253
  %v286 = vpack.c.b16 %v254, %v254
  %v287 = vpack.c.b16 %v255, %v255
  %v288 = vpack.c.b16 %v256, %v256
  %v289 = vpack.c.b16 %v257, %v257
  %v450 = vunpack.c.l.b16 %v42
  %v451 = vunpack.c.l.b16 %v43
  %v452 = vunpack.c.l.b16 %v44
  %v453 = vunpack.c.l.b16 %v45
  %v454 = vunpack.c.l.b16 %v46
  %v455 = vunpack.c.l.b16 %v47
  %v456 = vunpack.c.l.b16 %v48
  %v457 = vunpack.c.l.b16 %v49
  %v458 = vunpack.c.l.b16 %v50
  %v459 = vunpack.c.l.b16 %v51
  %v460 = vunpack.c.l.b16 %v52
  %v461 = vunpack.c.l.b16 %v53
  %v462 = vunpack.c.l.b16 %v54
  %v463 = vunpack.c.l.b16 %v55
  %v464 = vunpack.c.l.b16 %v56
  %v465 = vunpack.c.l.b16 %v57
  %v466 = vunpack.c.l.b16 %v58
  %v467 = vunpack.c.l.b16 %v59
  %v468 = vunpack.c.l.b16 %v60
  %v469 = vunpack.c.l.b16 %v61
  %v470 = vunpack.c.l.b16 %v62
  %v471 = vunpack.c.l.b16 %v63
  %v472 = vunpack.c.l.b16 %v64
  %v473 = vunpack.c.l.b16 %v65
  %v474 = vunpack.c.l.b16 %v66
  %v475 = vunpack.c.l.b16 %v67
  %v476 = vunpack.c.l.b16 %v68
  %v477 = vunpack.c.l.b16 %v69
  %v478 = vunpack.c.l.b16 %v70
  %v479 = vunpack.c.l.b16 %v71
  %v480 = vunpack.c.l.b16 %v72
  %v481 = vunpack.c.l.b16 %v73
  %v482 = vunpack.c.l.b16 %v74
  %v483 = vunpack.c.l.b16 %v75
  %v484 = vunpack.c.l.b16 %v76
  %v485 = vunpack.c.l.b16 %v77
  %v486 = vunpack.c.l.b16 %v78
  %v487 = vunpack.c.l.b16 %v79
  %v488 = vunpack.c.l.b16 %v80
  %v489 = vunpack.c.l.b16 %v81
  %v490 = vunpack.c.l.b16 %v82
  %v491 = vunpack.c.l.b16 %v83
  %v492 = vunpack.c.l.b16 %v84
  %v493 = vunpack.c.l.b16 %v85
  %v494 = vunpack.c.l.b16 %v86
  %v495 = vunpack.c.l.b16 %v87
  %v496 = vunpack.c.l.b16 %v88
  %v497 = vunpack.c.l.b16 %v89
  %v498 = vunpack.c.l.b16 %v90
  %v499 = vunpack.c.l.b16 %v91
  %v500 = vunpack.c.l.b16 %v92
  %v501 = vunpack.c.l.b16 %v93
  %v502 = vunpack.c.l.b16 %v94
  %v503 = vunpack.c.l.b16 %v95
  %v504 = vunpack.c.l.b16 %v96
  %v505 = vunpack.c.l.b16 %v97
  %v506 = vunpack.c.l.b16 %v98
  %v507 = vunpack.c.l.b16 %v99
  %v508 = vunpack.c.l.b16 %v100
  %v509 = vunpack.c.l.b16 %v101
  %v510 = vunpack.c.l.b16 %v102
  %v511 = vunpack.c.l.b16 %v103
  %v512 = vunpack.c.l.b16 %v104
  %v513 = vunpack.c.l.b16 %v105
  %v514 = vunpack.c.l.b16 %v106
  %v515 = vunpack.c.l.b16 %v107
  %v516 = vunpack.c.l.b16 %v108
  %v517 = vunpack.c.l.b16 %v109
  %v518 = vunpack.c.l.b16 %v110
  %v519 = vunpack.c.l.b16 %v111
  %v520 = vunpack.c.l.b16 %v112
  %v521 = vunpack.c.l.b16 %v113
  %v522 = vunpack.c.l.b16 %v114
  %v523 = vunpack.c.l.b16 %v115
  %v524 = vunpack.c.l.b16 %v116
  %v525 = vunpack.c.l.b16 %v117
  %v526 = vunpack.c.l.b16 %v118
  %v527 = vunpack.c.l.b16 %v119
  %v528 = vunpack.c.l.b16 %v120
  %v529 = vunpack.c.l.b16 %v121
  %v530 = vunpack.c.l.b16 %v122
  %v531 = vunpack.c.l.b16 %v123
  %v532 = vunpack.c.l.b16 %v124
  %v533 = vunpack.c.l.b16 %v125
  %v534 = vunpack.c.l.b16 %v126
  %v535 = vunpack.c.l.b16 %v127
  %v536 = vunpack.c.l.b16 %v128
  %v537 = vunpack.c.l.b16 %v129
  %v538 = vunpack.c.l.b16 %v130
  %v539 = vunpack.c.l.b16 %v131
  %v540 = vunpack.c.l.b16 %v132
  %v541 = vunpack.c.l.b16 %v133
  %v542 = vunpack.c.l.b16 %v134
  %v543 = vunpack.c.l.b16 %v135
  %v544 = vunpack.c.l.b16 %v136
  %v545 = vunpack.c.l.b16 %v137
  %v546 = vunpack.c.l.b16 %v138
  %v547 = vunpack.c.l.b16 %v139
  %v548 = vunpack.c.l.b16 %v140
  %v549 = vunpack.c.l.b16 %v141
  %v550 = vunpack.c.l.b16 %v142
  %v551 = vunpack.c.l.b16 %v143
  %v552 = vunpack.c.l.b16 %v144
  %v553 = vunpack.c.l.b16 %v145
  %v554 = vunpack.c.l.b16 %v146
  %v555 = vunpack.c.l.b16 %v147
  %v556 = vunpack.c.l.b16 %v148
  %v557 = vunpack.c.l.b16 %v149
  %v558 = vunpack.c.l.b16 %v150
  %v559 = vunpack.c.l.b16 %v151
  %v560 = vunpack.c.l.b16 %v152
  %v561 = vunpack.c.l.b16 %v153
  %v562 = vunpack.c.l.b16 %v154
  %v563 = vunpack.c.l.b16 %v155
  %v564 = vunpack.c.l.b16 %v156
  %v565 = vunpack.c.l.b16 %v157
  %v566 = vunpack.c.l.b16 %v158
  %v567 = vunpack.c.l.b16 %v159
  %v568 = vunpack.c.l.b16 %v160
  %v569 = vunpack.c.l.b16 %v161
  %v570 = vunpack.c.l.b16 %v162
  %v571 = vunpack.c.l.b16 %v163
  %v572 = vunpack.c.l.b16 %v164
  %v573 = vunpack.c.l.b16 %v165
  %v574 = vunpack.c.l.b16 %v166
  %v575 = vunpack.c.l.b16 %v167
  %v576 = vunpack.c.l.b16 %v168
  %v577 = vunpack.c.l.b16 %v169
  %v578 = vpack.c.b16 %v451, %v450
  %v579 = vpack.c.b16 %v453, %v452
  %v580 = vpack.c.b16 %v455, %v454
  %v581 = vpack.c.b16 %v457, %v456
  %v582 = vpack.c.b16 %v459, %v458
  %v583 = vpack.c.b16 %v461, %v460
  %v584 = vpack.c.b16 %v463, %v462
  %v585 = vpack.c.b16 %v465, %v464
  %v586 = vpack.c.b16 %v467, %v466
  %v587 = vpack.c.b16 %v469, %v468
  %v588 = vpack.c.b16 %v471, %v470
  %v589 = vpack.c.b16 %v473, %v472
  %v590 = vpack.c.b16 %v475, %v474
  %v591 = vpack.c.b16 %v477, %v476
  %v592 = vpack.c.b16 %v479, %v478
  %v593 = vpack.c.b16 %v481, %v480
  %v594 = vpack.c.b16 %v483, %v482
  %v595 = vpack.c.b16 %v485, %v484
  %v596 = vpack.c.b16 %v487, %v486
  %v597 = vpack.c.b16 %v489, %v488
  %v598 = vpack.c.b16 %v491, %v490
  %v599 = vpack.c.b16 %v493, %v492
  %v600 = vpack.c.b16 %v495, %v494
  %v601 = vpack.c.b16 %v497, %v496
  %v602 = vpack.c.b16 %v499, %v498
  %v603 = vpack.c.b16 %v501, %v500
  %v604 = vpack.c.b16 %v503, %v502
  %v605 = vpack.c.b16 %v505, %v504
  %v606 = vpack.c.b16 %v507, %v506
  %v607 = vpack.c.b16 %v509, %v508
  %v608 = vpack.c.b16 %v511, %v510
  %v609 = vpack.c.b16 %v513, %v512
  %v610 = vpack.c.b16 %v515, %v514
  %v611 = vpack.c.b16 %v517, %v516
  %v612 = vpack.c.b16 %v519, %v518
  %v613 = vpack.c.b16 %v521, %v520
  %v614 = vpack.c.b16 %v523, %v522
  %v615 = vpack.c.b16 %v525, %v524
  %v616 = vpack.c.b16 %v527, %v526
  %v617 = vpack.c.b16 %v529, %v528
  %v618 = vpack.c.b16 %v531, %v530
  %v619 = vpack.c.b16 %v533, %v532
  %v620 = vpack.c.b16 %v535, %v534
  %v621 = vpack.c.b16 %v537, %v536
  %v622 = vpack.c.b16 %v539, %v538
  %v623 = vpack.c.b16 %v541, %v540
  %v624 = vpack.c.b16 %v543, %v542
  %v625 = vpack.c.b16 %v545, %v544
  %v626 = vpack.c.b16 %v547, %v546
  %v627 = vpack.c.b16 %v549, %v548
  %v628 = vpack.c.b16 %v551, %v550
  %v629 = vpack.c.b16 %v553, %v552
  %v630 = vpack.c.b16 %v555, %v554
  %v631 = vpack.c.b16 %v557, %v556
  %v632 = vpack.c.b16 %v559, %v558
  %v633 = vpack.c.b16 %v561, %v560
  %v634 = vpack.c.b16 %v563, %v562
  %v635 = vpack.c.b16 %v565, %v564
  %v636 = vpack.c.b16 %v567, %v566
  %v637 = vpack.c.b16 %v569, %v568
  %v638 = vpack.c.b16 %v571, %v570
  %v639 = vpack.c.b16 %v573, %v572
  %v640 = vpack.c.b16 %v575, %v574
  %v641 = vpack.c.b16 %v577, %v576
  %706 = vmatpush.bf16.msra.mxu0 %v585
  %707 = vmatpush.bf16.msra.mxu0 %v584
  %708 = vmatpush.bf16.msra.mxu0 %v583
  %709 = vmatpush.bf16.msra.mxu0 %v582
  %710 = vmatpush.bf16.msra.mxu0 %v581
  %711 = vmatpush.bf16.msra.mxu0 %v580
  %712 = vmatpush.bf16.msra.mxu0 %v579
  %713 = vmatpush.bf16.msra.mxu0 %v578
  %714 = vmatmul.bf16.gmra.mxu0 %v258
  %v715 = vpop.f32.mrf.mxu0
  %v716 = vadd.f32 %v172, %v715
  %v717 = vpop.f32.mrf.mxu0
  %v718 = vadd.f32 %v172, %v717
  %719 = vmatmul.bf16.gmra.mxu0 %v266
  %v720 = vpop.f32.mrf.mxu0
  %v721 = vadd.f32 %v172, %v720
  %v722 = vpop.f32.mrf.mxu0
  %v723 = vadd.f32 %v172, %v722
  %724 = vmatmul.bf16.gmra.mxu0 %v274
  %v725 = vpop.f32.mrf.mxu0
  %v726 = vadd.f32 %v172, %v725
  %v727 = vpop.f32.mrf.mxu0
  %v728 = vadd.f32 %v172, %v727
  %729 = vmatmul.bf16.gmra.mxu0 %v282
  %v730 = vpop.f32.mrf.mxu0
  %v731 = vadd.f32 %v172, %v730
  %v732 = vpop.f32.mrf.mxu0
  %733 = vdwg.mxu0
  %734 = vmatpush.bf16.msra.mxu0 %v593
  %735 = vmatpush.bf16.msra.mxu0 %v592
  %736 = vmatpush.bf16.msra.mxu0 %v591
  %737 = vmatpush.bf16.msra.mxu0 %v590
  %738 = vmatpush.bf16.msra.mxu0 %v589
  %739 = vmatpush.bf16.msra.mxu0 %v588
  %740 = vmatpush.bf16.msra.mxu0 %v587
  %741 = vmatpush.bf16.msra.mxu0 %v586
  %742 = vmatmul.bf16.gmra.mxu0 %v259
  %v743 = vpop.f32.mrf.mxu0
  %v744 = vadd.f32 %v716, %v743
  %v745 = vpop.f32.mrf.mxu0
  %v746 = vadd.f32 %v718, %v745
  %747 = vmatmul.bf16.gmra.mxu0 %v267
  %v748 = vpop.f32.mrf.mxu0
  %v749 = vadd.f32 %v721, %v748
  %v750 = vpop.f32.mrf.mxu0
  %v751 = vadd.f32 %v723, %v750
  %752 = vmatmul.bf16.gmra.mxu0 %v275
  %v753 = vpop.f32.mrf.mxu0
  %v754 = vadd.f32 %v726, %v753
  %v755 = vpop.f32.mrf.mxu0
  %v756 = vadd.f32 %v728, %v755
  %757 = vmatmul.bf16.gmra.mxu0 %v283
  %v758 = vpop.f32.mrf.mxu0
  %v759 = vadd.f32 %v731, %v758
  %v760 = vpop.f32.mrf.mxu0
  %761 = vdwg.mxu0
  %762 = vmatpush.bf16.msra.mxu0 %v601
  %763 = vmatpush.bf16.msra.mxu0 %v600
  %764 = vmatpush.bf16.msra.mxu0 %v599
  %765 = vmatpush.bf16.msra.mxu0 %v598
  %766 = vmatpush.bf16.msra.mxu0 %v597
  %767 = vmatpush.bf16.msra.mxu0 %v596
  %768 = vmatpush.bf16.msra.mxu0 %v595
  %769 = vmatpush.bf16.msra.mxu0 %v594
  %770 = vmatmul.bf16.gmra.mxu0 %v260
  %v771 = vpop.f32.mrf.mxu0
  %v772 = vadd.f32 %v744, %v771
  %v773 = vpop.f32.mrf.mxu0
  %v774 = vadd.f32 %v746, %v773
  %775 = vmatmul.bf16.gmra.mxu0 %v268
  %v776 = vpop.f32.mrf.mxu0
  %v777 = vadd.f32 %v749, %v776
  %v778 = vpop.f32.mrf.mxu0
  %v779 = vadd.f32 %v751, %v778
  %780 = vmatmul.bf16.gmra.mxu0 %v276
  %v781 = vpop.f32.mrf.mxu0
  %v782 = vadd.f32 %v754, %v781
  %v783 = vpop.f32.mrf.mxu0
  %v784 = vadd.f32 %v756, %v783
  %785 = vmatmul.bf16.gmra.mxu0 %v284
  %v786 = vpop.f32.mrf.mxu0
  %v787 = vadd.f32 %v759, %v786
  %v788 = vpop.f32.mrf.mxu0
  %789 = vdwg.mxu0
  %790 = vmatpush.bf16.msra.mxu0 %v609
  %791 = vmatpush.bf16.msra.mxu0 %v608
  %792 = vmatpush.bf16.msra.mxu0 %v607
  %793 = vmatpush.bf16.msra.mxu0 %v606
  %794 = vmatpush.bf16.msra.mxu0 %v605
  %795 = vmatpush.bf16.msra.mxu0 %v604
  %796 = vmatpush.bf16.msra.mxu0 %v603
  %797 = vmatpush.bf16.msra.mxu0 %v602
  %798 = vmatmul.bf16.gmra.mxu0 %v261
  %v799 = vpop.f32.mrf.mxu0
  %v800 = vadd.f32 %v772, %v799
  %v801 = vpop.f32.mrf.mxu0
  %v802 = vadd.f32 %v774, %v801
  %803 = vmatmul.bf16.gmra.mxu0 %v269
  %v804 = vpop.f32.mrf.mxu0
  %v805 = vadd.f32 %v777, %v804
  %v806 = vpop.f32.mrf.mxu0
  %v807 = vadd.f32 %v779, %v806
  %808 = vmatmul.bf16.gmra.mxu0 %v277
  %v809 = vpop.f32.mrf.mxu0
  %v810 = vadd.f32 %v782, %v809
  %v811 = vpop.f32.mrf.mxu0
  %v812 = vadd.f32 %v784, %v811
  %813 = vmatmul.bf16.gmra.mxu0 %v285
  %v814 = vpop.f32.mrf.mxu0
  %v815 = vadd.f32 %v787, %v814
  %v816 = vpop.f32.mrf.mxu0
  %817 = vdwg.mxu0
  %818 = vmatpush.bf16.msra.mxu0 %v617
  %819 = vmatpush.bf16.msra.mxu0 %v616
  %820 = vmatpush.bf16.msra.mxu0 %v615
  %821 = vmatpush.bf16.msra.mxu0 %v614
  %822 = vmatpush.bf16.msra.mxu0 %v613
  %823 = vmatpush.bf16.msra.mxu0 %v612
  %824 = vmatpush.bf16.msra.mxu0 %v611
  %825 = vmatpush.bf16.msra.mxu0 %v610
  %826 = vmatmul.bf16.gmra.mxu0 %v262
  %v827 = vpop.f32.mrf.mxu0
  %v828 = vadd.f32 %v800, %v827
  %v829 = vpop.f32.mrf.mxu0
  %v830 = vadd.f32 %v802, %v829
  %831 = vmatmul.bf16.gmra.mxu0 %v270
  %v832 = vpop.f32.mrf.mxu0
  %v833 = vadd.f32 %v805, %v832
  %v834 = vpop.f32.mrf.mxu0
  %v835 = vadd.f32 %v807, %v834
  %836 = vmatmul.bf16.gmra.mxu0 %v278
  %v837 = vpop.f32.mrf.mxu0
  %v838 = vadd.f32 %v810, %v837
  %v839 = vpop.f32.mrf.mxu0
  %v840 = vadd.f32 %v812, %v839
  %841 = vmatmul.bf16.gmra.mxu0 %v286
  %v842 = vpop.f32.mrf.mxu0
  %v843 = vadd.f32 %v815, %v842
  %v844 = vpop.f32.mrf.mxu0
  %845 = vdwg.mxu0
  %846 = vmatpush.bf16.msra.mxu0 %v625
  %847 = vmatpush.bf16.msra.mxu0 %v624
  %848 = vmatpush.bf16.msra.mxu0 %v623
  %849 = vmatpush.bf16.msra.mxu0 %v622
  %850 = vmatpush.bf16.msra.mxu0 %v621
  %851 = vmatpush.bf16.msra.mxu0 %v620
  %852 = vmatpush.bf16.msra.mxu0 %v619
  %853 = vmatpush.bf16.msra.mxu0 %v618
  %854 = vmatmul.bf16.gmra.mxu0 %v263
  %v855 = vpop.f32.mrf.mxu0
  %v856 = vadd.f32 %v828, %v855
  %v857 = vpop.f32.mrf.mxu0
  %v858 = vadd.f32 %v830, %v857
  %859 = vmatmul.bf16.gmra.mxu0 %v271
  %v860 = vpop.f32.mrf.mxu0
  %v861 = vadd.f32 %v833, %v860
  %v862 = vpop.f32.mrf.mxu0
  %v863 = vadd.f32 %v835, %v862
  %864 = vmatmul.bf16.gmra.mxu0 %v279
  %v865 = vpop.f32.mrf.mxu0
  %v866 = vadd.f32 %v838, %v865
  %v867 = vpop.f32.mrf.mxu0
  %v868 = vadd.f32 %v840, %v867
  %869 = vmatmul.bf16.gmra.mxu0 %v287
  %v870 = vpop.f32.mrf.mxu0
  %v871 = vadd.f32 %v843, %v870
  %v872 = vpop.f32.mrf.mxu0
  %873 = vdwg.mxu0
  %874 = vmatpush.bf16.msra.mxu0 %v633
  %875 = vmatpush.bf16.msra.mxu0 %v632
  %876 = vmatpush.bf16.msra.mxu0 %v631
  %877 = vmatpush.bf16.msra.mxu0 %v630
  %878 = vmatpush.bf16.msra.mxu0 %v629
  %879 = vmatpush.bf16.msra.mxu0 %v628
  %880 = vmatpush.bf16.msra.mxu0 %v627
  %881 = vmatpush.bf16.msra.mxu0 %v626
  %882 = vmatmul.bf16.gmra.mxu0 %v264
  %v883 = vpop.f32.mrf.mxu0
  %v884 = vadd.f32 %v856, %v883
  %v885 = vpop.f32.mrf.mxu0
  %v886 = vadd.f32 %v858, %v885
  %887 = vmatmul.bf16.gmra.mxu0 %v272
  %v888 = vpop.f32.mrf.mxu0
  %v889 = vadd.f32 %v861, %v888
  %v890 = vpop.f32.mrf.mxu0
  %v891 = vadd.f32 %v863, %v890
  %892 = vmatmul.bf16.gmra.mxu0 %v280
  %v893 = vpop.f32.mrf.mxu0
  %v894 = vadd.f32 %v866, %v893
  %v895 = vpop.f32.mrf.mxu0
  %v896 = vadd.f32 %v868, %v895
  %897 = vmatmul.bf16.gmra.mxu0 %v288
  %v898 = vpop.f32.mrf.mxu0
  %v899 = vadd.f32 %v871, %v898
  %v900 = vpop.f32.mrf.mxu0
  %901 = vdwg.mxu0
  %902 = vmatpush.bf16.msra.mxu0 %v641
  %903 = vmatpush.bf16.msra.mxu0 %v640
  %904 = vmatpush.bf16.msra.mxu0 %v639
  %905 = vmatpush.bf16.msra.mxu0 %v638
  %906 = vmatpush.bf16.msra.mxu0 %v637
  %907 = vmatpush.bf16.msra.mxu0 %v636
  %908 = vmatpush.bf16.msra.mxu0 %v635
  %909 = vmatpush.bf16.msra.mxu0 %v634
  %910 = vmatmul.bf16.gmra.mxu0 %v265
  %v911 = vpop.f32.mrf.mxu0
  %v912 = vadd.f32 %v884, %v911
  %v913 = vpop.f32.mrf.mxu0
  %v914 = vadd.f32 %v886, %v913
  %915 = vmatmul.bf16.gmra.mxu0 %v273
  %v916 = vpop.f32.mrf.mxu0
  %v917 = vadd.f32 %v889, %v916
  %v918 = vpop.f32.mrf.mxu0
  %v919 = vadd.f32 %v891, %v918
  %920 = vmatmul.bf16.gmra.mxu0 %v281
  %v921 = vpop.f32.mrf.mxu0
  %v922 = vadd.f32 %v894, %v921
  %v923 = vpop.f32.mrf.mxu0
  %v924 = vadd.f32 %v896, %v923
  %925 = vmatmul.bf16.gmra.mxu0 %v289
  %v926 = vpop.f32.mrf.mxu0
  %v927 = vadd.f32 %v899, %v926
  %v928 = vpop.f32.mrf.mxu0
  %929 = vdwg.mxu0
  %930 = vst [vmem:[%s3] sm:$0xff] %v912
  %931 = vst [vmem:[%s3 + $0x8] sm:$0xff] %v914
  %932 = vst [vmem:[%s3 + $0x10] sm:$0xff] %v917
  %933 = vst [vmem:[%s3 + $0x18] sm:$0xff] %v919
  %934 = vst [vmem:[%s3 + $0x20] sm:$0xff] %v922
  %935 = vst [vmem:[%s3 + $0x28] sm:$0xff] %v924
  %936 = vst [vmem:[%s3 + $0x30] sm:$0x3] %v927
  // Predicated region
  $region14: #{nlayer_discriminator_forward.9} parent=0 // pred_check
    _
  $region15: #{nlayer_discriminator_forward.9} parent=0 // pred_check_branch
    %938 = sbr.rel (0) target = $region17
  $region16: #{nlayer_discriminator_forward.9} parent=0 // pred_region
    _
  $region17: #{nlayer_discriminator_forward.9} parent=0 // pred_fallthru
    _
  // Predicated region
  $region18: #{nlayer_discriminator_forward.9} parent=0 // pred_check
    _
  $region19: #{nlayer_discriminator_forward.9} parent=0 // pred_check_branch
    %940 = sbr.rel (0) target = $region21
  $region20: #{nlayer_discriminator_forward.9} parent=0 // pred_region
    _
  $region21: #{nlayer_discriminator_forward.9} parent=0 // pred_fallthru
    _

</llo_original>
